<compile_context>
chip_gen: v6e
topology: v6e:2x2x1
jax: 0.10.0
libtpu: 0.0.40
codegen_flags: <defaults>
</compile_context>

<pallas_src>
import jax
import jax.numpy as jnp
from jax.experimental import pallas as pl
from jax.experimental.pallas import tpu as pltpu

EPS = 1e-5


def _mlp_kernel(x_ref, small_ref, w5_ref, wbig_hbm, o_ref, wbuf, sem):
    """Refs:
      x_ref     : (B, 8)        VMEM   input activations
      small_ref : (16, N)       VMEM   rows [0:8]=W1, [8:12]=BN gammas, [12:16]=BN betas
      w5_ref    : (N+8, 128)    VMEM   rows [0:N]=W5 (2 cols padded to 128), row N = b5
      wbig_hbm  : (3, N, N)     ANY    W2/W3/W4, manually DMA'd per layer
      o_ref     : (B, 128)      VMEM   lane-dense output slab (logical cols 0:2)
      wbuf      : (2, N, N) f32 VMEM   double buffer for per-layer weight tiles
      sem       : DMA sem (2,)
    """
    n = wbuf.shape[1]

    # Per-layer weight copies (Python-unrolled; descriptors reused for wait()).
    copies = [
        pltpu.make_async_copy(wbig_hbm.at[l], wbuf.at[l & 1], sem.at[l & 1])
        for l in range(3)
    ]
    # Kick off W2 immediately: it overlaps the fc1 + BN1 + ReLU compute below,
    # which only needs x and the 16 KB small slab.
    copies[0].start()

    def bn_relu(h, layer):
        g = small_ref[8 + layer:9 + layer, :]        # (1, N)
        be = small_ref[12 + layer:13 + layer, :]     # (1, N)
        mu = jnp.mean(h, axis=0, keepdims=True)
        var = jnp.mean((h - mu) * (h - mu), axis=0, keepdims=True)   # two-pass
        a = g * jax.lax.rsqrt(var + EPS)             # folded scale (gamma * inv-std)
        b = be - mu * a
        return jnp.maximum(h * a + b, 0.0)

    x = x_ref[...].astype(jnp.float32)
    h = jnp.dot(x, small_ref[0:8, :], preferred_element_type=jnp.float32)
    h = bn_relu(h, 0)

    for l in range(3):                               # layers fc2..fc4
        slot = l & 1
        copies[l].wait()                             # W_{l+2} now resident in wbuf[slot]
        if l + 1 < 3:
            copies[l + 1].start()                    # prefetch next layer into other slot
        h = jnp.dot(h, wbuf[slot], preferred_element_type=jnp.float32)
        h = bn_relu(h, l + 1)

    out = jnp.dot(h, w5_ref[0:n, :], preferred_element_type=jnp.float32)
    o_ref[...] = (out + w5_ref[n:n + 1, :]).astype(o_ref.dtype)


def mlp_forward(x, small, w5slab, wbig):
    """x: [B, 8] f32; small: [16, N]; w5slab: [N+8, 128]; wbig: [3, N, N].
    Returns [B, 2]."""
    B = x.shape[0]
    n_unit = wbig.shape[1]
    out_pad = w5slab.shape[1]
    vmem = pl.BlockSpec(memory_space=pltpu.MemorySpace.VMEM)
    out = pl.pallas_call(
        _mlp_kernel,
        out_shape=jax.ShapeDtypeStruct((B, out_pad), jnp.float32),
        in_specs=[vmem, vmem, vmem, pl.BlockSpec(memory_space=pl.ANY)],
        out_specs=vmem,
        scratch_shapes=[pltpu.VMEM((2, n_unit, n_unit), jnp.float32),
                        pltpu.SemaphoreType.DMA((2,))],
        compiler_params=pltpu.CompilerParams(vmem_limit_bytes=8 << 20),
    )(x, small, w5slab, wbig)
    return out[:, :2]          # lane-dense kernel output, slice to logical width


def pack_params(params, n_unit=256, out_pad=128):
    """Pack parameters into three slabs:
       small  (16, N)      : W1 + BN gammas + BN betas
       w5slab (N+8, 128)   : W5 padded to 128 out cols, row N = b5 padded
       wbig   (3, N, N)    : W2 / W3 / W4 (kept in HBM, DMA'd per layer)
    b1..b4 are dropped (exactly cancelled by training-mode BatchNorm)."""
    (w1, _b1, g1, be1,
     w2, _b2, g2, be2,
     w3, _b3, g3, be3,
     w4, _b4, g4, be4,
     w5, b5) = params

    small = jnp.zeros((16, n_unit), jnp.float32)
    small = small.at[0:8, :].set(w1)
    small = small.at[8:12, :].set(jnp.concatenate([g1, g2, g3, g4], axis=0))
    small = small.at[12:16, :].set(jnp.concatenate([be1, be2, be3, be4], axis=0))

    w5slab = jnp.zeros((n_unit + 8, out_pad), jnp.float32)
    w5slab = w5slab.at[0:n_unit, 0:w5.shape[1]].set(w5)
    w5slab = w5slab.at[n_unit, 0:b5.shape[1]].set(b5[0])

    wbig = jnp.stack([w2, w3, w4], axis=0)            # (3, N, N)
    return small, w5slab, wbig


def init_params(key, n_unit=256):
    """Deterministic synthetic init mirroring the PyTorch module's parameter shapes.
    Linear weights stored as [in, out] (transposed vs torch). BN gamma=1, beta=0."""
    keys = jax.random.split(key, 10)

    def kaiming(k, fan_in, fan_out):
        std = jnp.sqrt(2.0 / fan_in)  # kaiming_normal_ (fan_in, relu)
        return jax.random.normal(k, (fan_in, fan_out), jnp.float32) * std

    def xavier(k, fan_in, fan_out):
        std = jnp.sqrt(2.0 / (fan_in + fan_out))  # xavier_normal_
        return jax.random.normal(k, (fan_in, fan_out), jnp.float32) * std

    def bias(k, fan_in, fan_out):
        bound = 1.0 / jnp.sqrt(fan_in)  # torch Linear default bias init
        return jax.random.uniform(k, (1, fan_out), jnp.float32, -bound, bound)

    w1 = kaiming(keys[0], 8, n_unit);        b1 = bias(keys[1], 8, n_unit)
    w2 = kaiming(keys[2], n_unit, n_unit);   b2 = bias(keys[3], n_unit, n_unit)
    w3 = kaiming(keys[4], n_unit, n_unit);   b3 = bias(keys[5], n_unit, n_unit)
    # fc4 weight: kaiming_normal_ then overwritten by xavier_normal_ (as in the module)
    w4 = xavier(keys[6], n_unit, n_unit);    b4 = bias(keys[7], n_unit, n_unit)
    w5_bound = 1.0 / jnp.sqrt(n_unit)        # fc5 keeps torch default uniform init
    w5 = jax.random.uniform(keys[8], (n_unit, 2), jnp.float32, -w5_bound, w5_bound)
    b5 = bias(keys[9], n_unit, 2)

    ones = jnp.ones((1, n_unit), jnp.float32)
    zeros = jnp.zeros((1, n_unit), jnp.float32)
    g1, be1 = ones, zeros
    g2, be2 = ones, zeros
    g3, be3 = ones, zeros
    g4, be4 = ones, zeros

    return [w1, b1, g1, be1,
            w2, b2, g2, be2,
            w3, b3, g3, be3,
            w4, b4, g4, be4,
            w5, b5]


def mlp_reference(x, params):
    """Pure-JAX reference, faithful to the PyTorch module (biases included,
    training-mode BatchNorm)."""
    (w1, b1, g1, be1, w2, b2, g2, be2,
     w3, b3, g3, be3, w4, b4, g4, be4, w5, b5) = params

    def bn_relu(h, g, be):
        mu = jnp.mean(h, axis=0, keepdims=True)
        var = jnp.mean((h - mu) ** 2, axis=0, keepdims=True)
        return jnp.maximum((h - mu) * jax.lax.rsqrt(var + EPS) * g + be, 0.0)

    h = bn_relu(x @ w1 + b1, g1, be1)
    h = bn_relu(h @ w2 + b2, g2, be2)
    h = bn_relu(h @ w3 + b3, g3, be3)
    h = bn_relu(h @ w4 + b4, g4, be4)
    return h @ w5 + b5


if __name__ == "__main__":
    key = jax.random.PRNGKey(0)
    k_x, k_p = jax.random.split(key)

    B, D_IN, N_UNIT = 8, 8, 256
    x = jax.random.normal(k_x, (B, D_IN), jnp.float32)
    params = init_params(k_p, n_unit=N_UNIT)
    small, w5slab, wbig = pack_params(params, n_unit=N_UNIT)

    out = mlp_forward(x, small, w5slab, wbig)
    out = jax.block_until_ready(out)

    ref = mlp_reference(x, params)
    assert out.shape == (B, 2)
    assert jnp.allclose(out, ref, atol=1e-4, rtol=1e-4), "mismatch vs JAX reference"

    print("KERNEL_OK")
</pallas_src>

<mosaic_0001>
module attributes {stable_mosaic.version = 11 : i64} {
  func.func @_mlp_kernel(%arg0: memref<8x8xf32, #tpu.memory_space<vmem>>, %arg1: memref<16x256xf32, #tpu.memory_space<vmem>>, %arg2: memref<264x128xf32, #tpu.memory_space<vmem>>, %arg3: memref<3x256x256xf32, #tpu.memory_space<any>>, %arg4: memref<8x128xf32, #tpu.memory_space<vmem>>, %arg5: memref<2x256x256xf32, #tpu.memory_space<vmem>>, %arg6: memref<2x!tpu.dma_semaphore, #tpu.memory_space<semaphore_mem>>) attributes {dimension_semantics = [], scalar_prefetch = 0 : i64, scratch_operands = 2 : i64, tpu.core_type = #tpu.core_type<tc>} {
    %c0_i32 = arith.constant 0 : i32
    %c0_i32_0 = arith.constant 0 : i32
    %c0_i32_1 = arith.constant 0 : i32
    %c0_i32_2 = arith.constant 0 : i32
    %c0_i32_3 = arith.constant 0 : i32
    %0 = tpu.memref_slice %arg3[%c0_i32, %c0_i32_2, %c0_i32_3] : memref<3x256x256xf32, #tpu.memory_space<any>> -> memref<1x256x256xf32, #tpu.memory_space<any>>
    %1 = tpu.memref_squeeze %0 : memref<1x256x256xf32, #tpu.memory_space<any>> -> memref<256x256xf32, #tpu.memory_space<any>>
    %c0_i32_4 = arith.constant 0 : i32
    %c0_i32_5 = arith.constant 0 : i32
    %2 = tpu.memref_slice %arg5[%c0_i32_0, %c0_i32_4, %c0_i32_5] : memref<2x256x256xf32, #tpu.memory_space<vmem>> -> memref<1x256x256xf32, #tpu.memory_space<vmem>>
    %3 = tpu.memref_squeeze %2 : memref<1x256x256xf32, #tpu.memory_space<vmem>> -> memref<256x256xf32, #tpu.memory_space<vmem>>
    %4 = tpu.memref_slice %arg6[%c0_i32_1] : memref<2x!tpu.dma_semaphore, #tpu.memory_space<semaphore_mem>> -> memref<1x!tpu.dma_semaphore, #tpu.memory_space<semaphore_mem>>
    %5 = tpu.memref_squeeze %4 : memref<1x!tpu.dma_semaphore, #tpu.memory_space<semaphore_mem>> -> memref<!tpu.dma_semaphore, #tpu.memory_space<semaphore_mem>>
    tpu.enqueue_dma source(%1 : memref<256x256xf32, #tpu.memory_space<any>>) target(%3 : memref<256x256xf32, #tpu.memory_space<vmem>>) target_semaphore(%5 : memref<!tpu.dma_semaphore, #tpu.memory_space<semaphore_mem>>)
    %c0 = arith.constant 0 : index
    %c0_6 = arith.constant 0 : index
    %6 = vector.load %arg0[%c0, %c0_6] : memref<8x8xf32, #tpu.memory_space<vmem>>, vector<8x8xf32>
    %c0_7 = arith.constant 0 : index
    %c0_8 = arith.constant 0 : index
    %7 = vector.load %arg1[%c0_7, %c0_8] : memref<16x256xf32, #tpu.memory_space<vmem>>, vector<8x256xf32>
    %cst = arith.constant dense<0.000000e+00> : vector<8x256xf32>
    %8 = tpu.matmul %6, %7, %cst {dimension_numbers = #tpu.dot_dimension_numbers<[1], [0], [0], [1], [0, 0, 1, 1], [], []>} : vector<8x8xf32>, vector<8x256xf32>, vector<8x256xf32> -> vector<8x256xf32>
    %c8 = arith.constant 8 : index
    %c0_9 = arith.constant 0 : index
    %9 = vector.load %arg1[%c8, %c0_9] : memref<16x256xf32, #tpu.memory_space<vmem>>, vector<1x256xf32>
    %c12 = arith.constant 12 : index
    %c0_10 = arith.constant 0 : index
    %10 = vector.load %arg1[%c12, %c0_10] : memref<16x256xf32, #tpu.memory_space<vmem>>, vector<1x256xf32>
    %cst_11 = arith.constant dense<0.000000e+00> : vector<256xf32>
    %11 = vector.multi_reduction <add>, %8, %cst_11 [0] : vector<8x256xf32> to vector<256xf32>
    %12 = vector.shape_cast %11 : vector<256xf32> to vector<1x256xf32>
    %cst_12 = arith.constant 8.000000e+00 : f32
    %13 = vector.broadcast %cst_12 : f32 to vector<1x256xf32>
    %14 = arith.divf %12, %13 : vector<1x256xf32>
    %15 = vector.broadcast %14 : vector<1x256xf32> to vector<8x256xf32>
    %16 = arith.subf %8, %15 : vector<8x256xf32>
    %17 = vector.broadcast %14 : vector<1x256xf32> to vector<8x256xf32>
    %18 = arith.subf %8, %17 : vector<8x256xf32>
    %19 = arith.mulf %16, %18 : vector<8x256xf32>
    %cst_13 = arith.constant dense<0.000000e+00> : vector<256xf32>
    %20 = vector.multi_reduction <add>, %19, %cst_13 [0] : vector<8x256xf32> to vector<256xf32>
    %21 = vector.shape_cast %20 : vector<256xf32> to vector<1x256xf32>
    %cst_14 = arith.constant 8.000000e+00 : f32
    %22 = vector.broadcast %cst_14 : f32 to vector<1x256xf32>
    %23 = arith.divf %21, %22 : vector<1x256xf32>
    %cst_15 = arith.constant 9.99999974E-6 : f32
    %24 = vector.broadcast %cst_15 : f32 to vector<1x256xf32>
    %25 = arith.addf %23, %24 : vector<1x256xf32>
    %26 = math.rsqrt %25 : vector<1x256xf32>
    %27 = arith.mulf %9, %26 : vector<1x256xf32>
    %28 = arith.mulf %14, %27 : vector<1x256xf32>
    %29 = arith.subf %10, %28 : vector<1x256xf32>
    %30 = vector.broadcast %27 : vector<1x256xf32> to vector<8x256xf32>
    %31 = arith.mulf %8, %30 : vector<8x256xf32>
    %32 = vector.broadcast %29 : vector<1x256xf32> to vector<8x256xf32>
    %33 = arith.addf %31, %32 : vector<8x256xf32>
    %cst_16 = arith.constant 0.000000e+00 : f32
    %34 = vector.broadcast %cst_16 : f32 to vector<8x256xf32>
    %35 = arith.maximumf %33, %34 : vector<8x256xf32>
    %c0_i32_17 = arith.constant 0 : i32
    %c0_i32_18 = arith.constant 0 : i32
    %c0_i32_19 = arith.constant 0 : i32
    %c0_i32_20 = arith.constant 0 : i32
    %c0_i32_21 = arith.constant 0 : i32
    %36 = tpu.memref_slice %arg3[%c0_i32_17, %c0_i32_20, %c0_i32_21] : memref<3x256x256xf32, #tpu.memory_space<any>> -> memref<1x256x256xf32, #tpu.memory_space<any>>
    %37 = tpu.memref_squeeze %36 : memref<1x256x256xf32, #tpu.memory_space<any>> -> memref<256x256xf32, #tpu.memory_space<any>>
    %c0_i32_22 = arith.constant 0 : i32
    %c0_i32_23 = arith.constant 0 : i32
    %38 = tpu.memref_slice %arg5[%c0_i32_18, %c0_i32_22, %c0_i32_23] : memref<2x256x256xf32, #tpu.memory_space<vmem>> -> memref<1x256x256xf32, #tpu.memory_space<vmem>>
    %39 = tpu.memref_squeeze %38 : memref<1x256x256xf32, #tpu.memory_space<vmem>> -> memref<256x256xf32, #tpu.memory_space<vmem>>
    %40 = tpu.memref_slice %arg6[%c0_i32_19] : memref<2x!tpu.dma_semaphore, #tpu.memory_space<semaphore_mem>> -> memref<1x!tpu.dma_semaphore, #tpu.memory_space<semaphore_mem>>
    %41 = tpu.memref_squeeze %40 : memref<1x!tpu.dma_semaphore, #tpu.memory_space<semaphore_mem>> -> memref<!tpu.dma_semaphore, #tpu.memory_space<semaphore_mem>>
    tpu.wait_dma2 semaphore(%41 : memref<!tpu.dma_semaphore, #tpu.memory_space<semaphore_mem>>) src(%37 : memref<256x256xf32, #tpu.memory_space<any>>) dst(%39 : memref<256x256xf32, #tpu.memory_space<vmem>>)
    %c1_i32 = arith.constant 1 : i32
    %c1_i32_24 = arith.constant 1 : i32
    %c1_i32_25 = arith.constant 1 : i32
    %c0_i32_26 = arith.constant 0 : i32
    %c0_i32_27 = arith.constant 0 : i32
    %42 = tpu.memref_slice %arg3[%c1_i32, %c0_i32_26, %c0_i32_27] : memref<3x256x256xf32, #tpu.memory_space<any>> -> memref<1x256x256xf32, #tpu.memory_space<any>>
    %43 = tpu.memref_squeeze %42 : memref<1x256x256xf32, #tpu.memory_space<any>> -> memref<256x256xf32, #tpu.memory_space<any>>
    %c0_i32_28 = arith.constant 0 : i32
    %c0_i32_29 = arith.constant 0 : i32
    %44 = tpu.memref_slice %arg5[%c1_i32_24, %c0_i32_28, %c0_i32_29] : memref<2x256x256xf32, #tpu.memory_space<vmem>> -> memref<1x256x256xf32, #tpu.memory_space<vmem>>
    %45 = tpu.memref_squeeze %44 : memref<1x256x256xf32, #tpu.memory_space<vmem>> -> memref<256x256xf32, #tpu.memory_space<vmem>>
    %46 = tpu.memref_slice %arg6[%c1_i32_25] : memref<2x!tpu.dma_semaphore, #tpu.memory_space<semaphore_mem>> -> memref<1x!tpu.dma_semaphore, #tpu.memory_space<semaphore_mem>>
    %47 = tpu.memref_squeeze %46 : memref<1x!tpu.dma_semaphore, #tpu.memory_space<semaphore_mem>> -> memref<!tpu.dma_semaphore, #tpu.memory_space<semaphore_mem>>
    tpu.enqueue_dma source(%43 : memref<256x256xf32, #tpu.memory_space<any>>) target(%45 : memref<256x256xf32, #tpu.memory_space<vmem>>) target_semaphore(%47 : memref<!tpu.dma_semaphore, #tpu.memory_space<semaphore_mem>>)
    %c0_30 = arith.constant 0 : index
    %c0_31 = arith.constant 0 : index
    %c0_32 = arith.constant 0 : index
    %48 = vector.load %arg5[%c0_30, %c0_31, %c0_32] : memref<2x256x256xf32, #tpu.memory_space<vmem>>, vector<1x256x256xf32>
    %49 = vector.shape_cast %48 : vector<1x256x256xf32> to vector<256x256xf32>
    %cst_33 = arith.constant dense<0.000000e+00> : vector<8x256xf32>
    %50 = tpu.matmul %35, %49, %cst_33 {dimension_numbers = #tpu.dot_dimension_numbers<[1], [0], [0], [1], [0, 0, 1, 1], [], []>} : vector<8x256xf32>, vector<256x256xf32>, vector<8x256xf32> -> vector<8x256xf32>
    %c9 = arith.constant 9 : index
    %c0_34 = arith.constant 0 : index
    %51 = vector.load %arg1[%c9, %c0_34] : memref<16x256xf32, #tpu.memory_space<vmem>>, vector<1x256xf32>
    %c13 = arith.constant 13 : index
    %c0_35 = arith.constant 0 : index
    %52 = vector.load %arg1[%c13, %c0_35] : memref<16x256xf32, #tpu.memory_space<vmem>>, vector<1x256xf32>
    %cst_36 = arith.constant dense<0.000000e+00> : vector<256xf32>
    %53 = vector.multi_reduction <add>, %50, %cst_36 [0] : vector<8x256xf32> to vector<256xf32>
    %54 = vector.shape_cast %53 : vector<256xf32> to vector<1x256xf32>
    %cst_37 = arith.constant 8.000000e+00 : f32
    %55 = vector.broadcast %cst_37 : f32 to vector<1x256xf32>
    %56 = arith.divf %54, %55 : vector<1x256xf32>
    %57 = vector.broadcast %56 : vector<1x256xf32> to vector<8x256xf32>
    %58 = arith.subf %50, %57 : vector<8x256xf32>
    %59 = vector.broadcast %56 : vector<1x256xf32> to vector<8x256xf32>
    %60 = arith.subf %50, %59 : vector<8x256xf32>
    %61 = arith.mulf %58, %60 : vector<8x256xf32>
    %cst_38 = arith.constant dense<0.000000e+00> : vector<256xf32>
    %62 = vector.multi_reduction <add>, %61, %cst_38 [0] : vector<8x256xf32> to vector<256xf32>
    %63 = vector.shape_cast %62 : vector<256xf32> to vector<1x256xf32>
    %cst_39 = arith.constant 8.000000e+00 : f32
    %64 = vector.broadcast %cst_39 : f32 to vector<1x256xf32>
    %65 = arith.divf %63, %64 : vector<1x256xf32>
    %cst_40 = arith.constant 9.99999974E-6 : f32
    %66 = vector.broadcast %cst_40 : f32 to vector<1x256xf32>
    %67 = arith.addf %65, %66 : vector<1x256xf32>
    %68 = math.rsqrt %67 : vector<1x256xf32>
    %69 = arith.mulf %51, %68 : vector<1x256xf32>
    %70 = arith.mulf %56, %69 : vector<1x256xf32>
    %71 = arith.subf %52, %70 : vector<1x256xf32>
    %72 = vector.broadcast %69 : vector<1x256xf32> to vector<8x256xf32>
    %73 = arith.mulf %50, %72 : vector<8x256xf32>
    %74 = vector.broadcast %71 : vector<1x256xf32> to vector<8x256xf32>
    %75 = arith.addf %73, %74 : vector<8x256xf32>
    %cst_41 = arith.constant 0.000000e+00 : f32
    %76 = vector.broadcast %cst_41 : f32 to vector<8x256xf32>
    %77 = arith.maximumf %75, %76 : vector<8x256xf32>
    %c1_i32_42 = arith.constant 1 : i32
    %c1_i32_43 = arith.constant 1 : i32
    %c1_i32_44 = arith.constant 1 : i32
    %c0_i32_45 = arith.constant 0 : i32
    %c0_i32_46 = arith.constant 0 : i32
    %78 = tpu.memref_slice %arg3[%c1_i32_42, %c0_i32_45, %c0_i32_46] : memref<3x256x256xf32, #tpu.memory_space<any>> -> memref<1x256x256xf32, #tpu.memory_space<any>>
    %79 = tpu.memref_squeeze %78 : memref<1x256x256xf32, #tpu.memory_space<any>> -> memref<256x256xf32, #tpu.memory_space<any>>
    %c0_i32_47 = arith.constant 0 : i32
    %c0_i32_48 = arith.constant 0 : i32
    %80 = tpu.memref_slice %arg5[%c1_i32_43, %c0_i32_47, %c0_i32_48] : memref<2x256x256xf32, #tpu.memory_space<vmem>> -> memref<1x256x256xf32, #tpu.memory_space<vmem>>
    %81 = tpu.memref_squeeze %80 : memref<1x256x256xf32, #tpu.memory_space<vmem>> -> memref<256x256xf32, #tpu.memory_space<vmem>>
    %82 = tpu.memref_slice %arg6[%c1_i32_44] : memref<2x!tpu.dma_semaphore, #tpu.memory_space<semaphore_mem>> -> memref<1x!tpu.dma_semaphore, #tpu.memory_space<semaphore_mem>>
    %83 = tpu.memref_squeeze %82 : memref<1x!tpu.dma_semaphore, #tpu.memory_space<semaphore_mem>> -> memref<!tpu.dma_semaphore, #tpu.memory_space<semaphore_mem>>
    tpu.wait_dma2 semaphore(%83 : memref<!tpu.dma_semaphore, #tpu.memory_space<semaphore_mem>>) src(%79 : memref<256x256xf32, #tpu.memory_space<any>>) dst(%81 : memref<256x256xf32, #tpu.memory_space<vmem>>)
    %c2_i32 = arith.constant 2 : i32
    %c0_i32_49 = arith.constant 0 : i32
    %c0_i32_50 = arith.constant 0 : i32
    %c0_i32_51 = arith.constant 0 : i32
    %c0_i32_52 = arith.constant 0 : i32
    %84 = tpu.memref_slice %arg3[%c2_i32, %c0_i32_51, %c0_i32_52] : memref<3x256x256xf32, #tpu.memory_space<any>> -> memref<1x256x256xf32, #tpu.memory_space<any>>
    %85 = tpu.memref_squeeze %84 : memref<1x256x256xf32, #tpu.memory_space<any>> -> memref<256x256xf32, #tpu.memory_space<any>>
    %c0_i32_53 = arith.constant 0 : i32
    %c0_i32_54 = arith.constant 0 : i32
    %86 = tpu.memref_slice %arg5[%c0_i32_49, %c0_i32_53, %c0_i32_54] : memref<2x256x256xf32, #tpu.memory_space<vmem>> -> memref<1x256x256xf32, #tpu.memory_space<vmem>>
    %87 = tpu.memref_squeeze %86 : memref<1x256x256xf32, #tpu.memory_space<vmem>> -> memref<256x256xf32, #tpu.memory_space<vmem>>
    %88 = tpu.memref_slice %arg6[%c0_i32_50] : memref<2x!tpu.dma_semaphore, #tpu.memory_space<semaphore_mem>> -> memref<1x!tpu.dma_semaphore, #tpu.memory_space<semaphore_mem>>
    %89 = tpu.memref_squeeze %88 : memref<1x!tpu.dma_semaphore, #tpu.memory_space<semaphore_mem>> -> memref<!tpu.dma_semaphore, #tpu.memory_space<semaphore_mem>>
    tpu.enqueue_dma source(%85 : memref<256x256xf32, #tpu.memory_space<any>>) target(%87 : memref<256x256xf32, #tpu.memory_space<vmem>>) target_semaphore(%89 : memref<!tpu.dma_semaphore, #tpu.memory_space<semaphore_mem>>)
    %c1 = arith.constant 1 : index
    %c0_55 = arith.constant 0 : index
    %c0_56 = arith.constant 0 : index
    %90 = vector.load %arg5[%c1, %c0_55, %c0_56] : memref<2x256x256xf32, #tpu.memory_space<vmem>>, vector<1x256x256xf32>
    %91 = vector.shape_cast %90 : vector<1x256x256xf32> to vector<256x256xf32>
    %cst_57 = arith.constant dense<0.000000e+00> : vector<8x256xf32>
    %92 = tpu.matmul %77, %91, %cst_57 {dimension_numbers = #tpu.dot_dimension_numbers<[1], [0], [0], [1], [0, 0, 1, 1], [], []>} : vector<8x256xf32>, vector<256x256xf32>, vector<8x256xf32> -> vector<8x256xf32>
    %c10 = arith.constant 10 : index
    %c0_58 = arith.constant 0 : index
    %93 = vector.load %arg1[%c10, %c0_58] : memref<16x256xf32, #tpu.memory_space<vmem>>, vector<1x256xf32>
    %c14 = arith.constant 14 : index
    %c0_59 = arith.constant 0 : index
    %94 = vector.load %arg1[%c14, %c0_59] : memref<16x256xf32, #tpu.memory_space<vmem>>, vector<1x256xf32>
    %cst_60 = arith.constant dense<0.000000e+00> : vector<256xf32>
    %95 = vector.multi_reduction <add>, %92, %cst_60 [0] : vector<8x256xf32> to vector<256xf32>
    %96 = vector.shape_cast %95 : vector<256xf32> to vector<1x256xf32>
    %cst_61 = arith.constant 8.000000e+00 : f32
    %97 = vector.broadcast %cst_61 : f32 to vector<1x256xf32>
    %98 = arith.divf %96, %97 : vector<1x256xf32>
    %99 = vector.broadcast %98 : vector<1x256xf32> to vector<8x256xf32>
    %100 = arith.subf %92, %99 : vector<8x256xf32>
    %101 = vector.broadcast %98 : vector<1x256xf32> to vector<8x256xf32>
    %102 = arith.subf %92, %101 : vector<8x256xf32>
    %103 = arith.mulf %100, %102 : vector<8x256xf32>
    %cst_62 = arith.constant dense<0.000000e+00> : vector<256xf32>
    %104 = vector.multi_reduction <add>, %103, %cst_62 [0] : vector<8x256xf32> to vector<256xf32>
    %105 = vector.shape_cast %104 : vector<256xf32> to vector<1x256xf32>
    %cst_63 = arith.constant 8.000000e+00 : f32
    %106 = vector.broadcast %cst_63 : f32 to vector<1x256xf32>
    %107 = arith.divf %105, %106 : vector<1x256xf32>
    %cst_64 = arith.constant 9.99999974E-6 : f32
    %108 = vector.broadcast %cst_64 : f32 to vector<1x256xf32>
    %109 = arith.addf %107, %108 : vector<1x256xf32>
    %110 = math.rsqrt %109 : vector<1x256xf32>
    %111 = arith.mulf %93, %110 : vector<1x256xf32>
    %112 = arith.mulf %98, %111 : vector<1x256xf32>
    %113 = arith.subf %94, %112 : vector<1x256xf32>
    %114 = vector.broadcast %111 : vector<1x256xf32> to vector<8x256xf32>
    %115 = arith.mulf %92, %114 : vector<8x256xf32>
    %116 = vector.broadcast %113 : vector<1x256xf32> to vector<8x256xf32>
    %117 = arith.addf %115, %116 : vector<8x256xf32>
    %cst_65 = arith.constant 0.000000e+00 : f32
    %118 = vector.broadcast %cst_65 : f32 to vector<8x256xf32>
    %119 = arith.maximumf %117, %118 : vector<8x256xf32>
    %c2_i32_66 = arith.constant 2 : i32
    %c0_i32_67 = arith.constant 0 : i32
    %c0_i32_68 = arith.constant 0 : i32
    %c0_i32_69 = arith.constant 0 : i32
    %c0_i32_70 = arith.constant 0 : i32
    %120 = tpu.memref_slice %arg3[%c2_i32_66, %c0_i32_69, %c0_i32_70] : memref<3x256x256xf32, #tpu.memory_space<any>> -> memref<1x256x256xf32, #tpu.memory_space<any>>
    %121 = tpu.memref_squeeze %120 : memref<1x256x256xf32, #tpu.memory_space<any>> -> memref<256x256xf32, #tpu.memory_space<any>>
    %c0_i32_71 = arith.constant 0 : i32
    %c0_i32_72 = arith.constant 0 : i32
    %122 = tpu.memref_slice %arg5[%c0_i32_67, %c0_i32_71, %c0_i32_72] : memref<2x256x256xf32, #tpu.memory_space<vmem>> -> memref<1x256x256xf32, #tpu.memory_space<vmem>>
    %123 = tpu.memref_squeeze %122 : memref<1x256x256xf32, #tpu.memory_space<vmem>> -> memref<256x256xf32, #tpu.memory_space<vmem>>
    %124 = tpu.memref_slice %arg6[%c0_i32_68] : memref<2x!tpu.dma_semaphore, #tpu.memory_space<semaphore_mem>> -> memref<1x!tpu.dma_semaphore, #tpu.memory_space<semaphore_mem>>
    %125 = tpu.memref_squeeze %124 : memref<1x!tpu.dma_semaphore, #tpu.memory_space<semaphore_mem>> -> memref<!tpu.dma_semaphore, #tpu.memory_space<semaphore_mem>>
    tpu.wait_dma2 semaphore(%125 : memref<!tpu.dma_semaphore, #tpu.memory_space<semaphore_mem>>) src(%121 : memref<256x256xf32, #tpu.memory_space<any>>) dst(%123 : memref<256x256xf32, #tpu.memory_space<vmem>>)
    %c0_73 = arith.constant 0 : index
    %c0_74 = arith.constant 0 : index
    %c0_75 = arith.constant 0 : index
    %126 = vector.load %arg5[%c0_73, %c0_74, %c0_75] : memref<2x256x256xf32, #tpu.memory_space<vmem>>, vector<1x256x256xf32>
    %127 = vector.shape_cast %126 : vector<1x256x256xf32> to vector<256x256xf32>
    %cst_76 = arith.constant dense<0.000000e+00> : vector<8x256xf32>
    %128 = tpu.matmul %119, %127, %cst_76 {dimension_numbers = #tpu.dot_dimension_numbers<[1], [0], [0], [1], [0, 0, 1, 1], [], []>} : vector<8x256xf32>, vector<256x256xf32>, vector<8x256xf32> -> vector<8x256xf32>
    %c11 = arith.constant 11 : index
    %c0_77 = arith.constant 0 : index
    %129 = vector.load %arg1[%c11, %c0_77] : memref<16x256xf32, #tpu.memory_space<vmem>>, vector<1x256xf32>
    %c15 = arith.constant 15 : index
    %c0_78 = arith.constant 0 : index
    %130 = vector.load %arg1[%c15, %c0_78] : memref<16x256xf32, #tpu.memory_space<vmem>>, vector<1x256xf32>
    %cst_79 = arith.constant dense<0.000000e+00> : vector<256xf32>
    %131 = vector.multi_reduction <add>, %128, %cst_79 [0] : vector<8x256xf32> to vector<256xf32>
    %132 = vector.shape_cast %131 : vector<256xf32> to vector<1x256xf32>
    %cst_80 = arith.constant 8.000000e+00 : f32
    %133 = vector.broadcast %cst_80 : f32 to vector<1x256xf32>
    %134 = arith.divf %132, %133 : vector<1x256xf32>
    %135 = vector.broadcast %134 : vector<1x256xf32> to vector<8x256xf32>
    %136 = arith.subf %128, %135 : vector<8x256xf32>
    %137 = vector.broadcast %134 : vector<1x256xf32> to vector<8x256xf32>
    %138 = arith.subf %128, %137 : vector<8x256xf32>
    %139 = arith.mulf %136, %138 : vector<8x256xf32>
    %cst_81 = arith.constant dense<0.000000e+00> : vector<256xf32>
    %140 = vector.multi_reduction <add>, %139, %cst_81 [0] : vector<8x256xf32> to vector<256xf32>
    %141 = vector.shape_cast %140 : vector<256xf32> to vector<1x256xf32>
    %cst_82 = arith.constant 8.000000e+00 : f32
    %142 = vector.broadcast %cst_82 : f32 to vector<1x256xf32>
    %143 = arith.divf %141, %142 : vector<1x256xf32>
    %cst_83 = arith.constant 9.99999974E-6 : f32
    %144 = vector.broadcast %cst_83 : f32 to vector<1x256xf32>
    %145 = arith.addf %143, %144 : vector<1x256xf32>
    %146 = math.rsqrt %145 : vector<1x256xf32>
    %147 = arith.mulf %129, %146 : vector<1x256xf32>
    %148 = arith.mulf %134, %147 : vector<1x256xf32>
    %149 = arith.subf %130, %148 : vector<1x256xf32>
    %150 = vector.broadcast %147 : vector<1x256xf32> to vector<8x256xf32>
    %151 = arith.mulf %128, %150 : vector<8x256xf32>
    %152 = vector.broadcast %149 : vector<1x256xf32> to vector<8x256xf32>
    %153 = arith.addf %151, %152 : vector<8x256xf32>
    %cst_84 = arith.constant 0.000000e+00 : f32
    %154 = vector.broadcast %cst_84 : f32 to vector<8x256xf32>
    %155 = arith.maximumf %153, %154 : vector<8x256xf32>
    %c0_85 = arith.constant 0 : index
    %c0_86 = arith.constant 0 : index
    %156 = vector.load %arg2[%c0_85, %c0_86] : memref<264x128xf32, #tpu.memory_space<vmem>>, vector<256x128xf32>
    %cst_87 = arith.constant dense<0.000000e+00> : vector<8x128xf32>
    %157 = tpu.matmul %155, %156, %cst_87 {dimension_numbers = #tpu.dot_dimension_numbers<[1], [0], [0], [1], [0, 0, 1, 1], [], []>} : vector<8x256xf32>, vector<256x128xf32>, vector<8x128xf32> -> vector<8x128xf32>
    %c256 = arith.constant 256 : index
    %c0_88 = arith.constant 0 : index
    %158 = vector.load %arg2[%c256, %c0_88] : memref<264x128xf32, #tpu.memory_space<vmem>>, vector<1x128xf32>
    %159 = vector.broadcast %158 : vector<1x128xf32> to vector<8x128xf32>
    %160 = arith.addf %157, %159 : vector<8x128xf32>
    %c0_89 = arith.constant 0 : index
    %c0_90 = arith.constant 0 : index
    %161 = vector.load %arg4[%c0_89, %c0_90] : memref<8x128xf32, #tpu.memory_space<vmem>>, vector<8x128xf32>
    tpu.vector_store %arg4[%c0_89, %c0_90], %160 {strides = array<i32>} : memref<8x128xf32, #tpu.memory_space<vmem>>, vector<8x128xf32>,
    return
  }
}

</mosaic_0001>

<llo_original>
// kernel: tpu_custom_call.1
$region0: #{tpu_custom_call.1}
  #allocation0 [shape = 'u32[]', space=smem, size = 0x4, offset = 0x4, fixed_abs, tag = 'smem constant byte address 0x4 - core index']
  #allocation1 [shape = 'u32[144,128]{1,0:T(1,128)}', space=vmem, size = 0x12000, scoped, tag = 'internal scratch']
  #allocation2 [shape = 'f32[2,256,256]{2,1,0:T(8,128)}', space=vmem, size = 0x80000, scoped, tag = 'scratch operand']
  #allocation3 [shape = 's32[2]{0}', space=sflag, size = 0x8, scoped, tag = 'scratch operand']
  #allocation11 [shape = 's32[]', space=sflag, size = 0x4, offset = 0, fixed_abs, tag = 'sflag constant byte address 0x0 - dummy sync flag']
  #allocation12 [shape = 's32[]', space=sflag, size = 0x4, offset = 0, fixed_abs, tag = 'sflag constant byte address 0x0 - dummy sync flag']
  #allocation13 [shape = 'u32[]', space=smem, size = 0x4, offset = 0x44, fixed_abs, tag = 'smem constant byte address 0x44 - assertion arg 0']
  #allocation14 [shape = 'u32[]', space=smem, size = 0x4, offset = 0x48, fixed_abs, tag = 'smem constant byte address 0x48 - assertion arg 1']
  #allocation15 [shape = 's32[]', space=sflag, size = 0x4, offset = 0, fixed_abs, tag = 'sflag constant byte address 0x0 - dummy sync flag']
  #allocation16 [shape = 's32[]', space=sflag, size = 0x4, offset = 0, fixed_abs, tag = 'sflag constant byte address 0x0 - dummy sync flag']
  #allocation17 [shape = 's32[]', space=sflag, size = 0x4, offset = 0, fixed_abs, tag = 'sflag constant byte address 0x0 - dummy sync flag']
  #allocation18 [shape = 's32[]', space=sflag, size = 0x4, offset = 0, fixed_abs, tag = 'sflag constant byte address 0x0 - dummy sync flag']
  %s0 = inlined_call_operand.hbm [shape: f32[8,8], index: 0, kind: input, shape index: {}]
  %s1 = inlined_call_operand.hbm [shape: f32[16,256], index: 1, kind: input, shape index: {}]
  %s2 = inlined_call_operand.hbm [shape: f32[264,128], index: 2, kind: input, shape index: {}]
  %s3 = inlined_call_operand.hbm [shape: f32[3,256,256], index: 3, kind: input, shape index: {}]
  %s4 = inlined_call_operand.hbm [shape: f32[8,128], index: 4, kind: output, shape index: {}]
  %s5 = sld [smem:[#allocation0]]
  $region46: #{tpu_custom_call.1} parent=0
    _
  %s7 = ssub.s32 1, %s5
  %s8 = scalar_select 0, %s7, %s5
  $region1: #{tpu_custom_call.1} parent=0
    #allocation4 [shape = 'u8[4096]{0}', space=vmem, size = 0x1000, scoped, tag = 'input window, operand 0, single buffered']
    #allocation5 [shape = 's32[1]{0}', space=sflag, size = 0x4, scoped, tag = 'scoped memory for tpu_custom_call.1']
    #allocation6 [shape = 's32[1]{0}', space=sflag, size = 0x4, scoped, tag = 'scoped memory for tpu_custom_call.1']
    #allocation7 [shape = 'u8[16384]{0}', space=vmem, size = 0x4000, scoped, tag = 'input window, operand 1, single buffered']
    #allocation8 [shape = 's32[1]{0}', space=sflag, size = 0x4, scoped, tag = 'scoped memory for tpu_custom_call.1']
    #allocation9 [shape = 'u8[135168]{0}', space=vmem, size = 0x21000, scoped, tag = 'input window, operand 2, single buffered']
    #allocation10 [shape = 'u8[4096]{0}', space=vmem, size = 0x1000, scoped, tag = 'output window, operand 0, single buffered']
    %9 = vsyncpa [#allocation5], 0
    %10 = vsyncpa [#allocation8], 0
    %11 = vsyncpa [#allocation6], 0
    // Predicated region
    $region2: #{tpu_custom_call.1} parent=1 // pred_check
      _
    $region3: #{tpu_custom_call.1} parent=1 // pred_check_branch
      %13 = sbr.rel (0) target = $region5
    $region4: #{tpu_custom_call.1} parent=1 // pred_region
      %s15 = ssub.s32 128, 128
      %16 = vsyncadd [#allocation5], %s15
      %s18 = sshll.u32 [#allocation4], 4
      %s19 = int_to_ptr.vmem [resolvable:$true] %s18
      %21 = dma.hbm_to_vmem [thread:$0]  %s0, 128, %s19, [#allocation5]
    $region5: #{tpu_custom_call.1} parent=1 // pred_fallthru
      _
    // Predicated region
    $region6: #{tpu_custom_call.1} parent=1 // pred_check
      _
    $region7: #{tpu_custom_call.1} parent=1 // pred_check_branch
      %23 = sbr.rel (0) target = $region9
    $region8: #{tpu_custom_call.1} parent=1 // pred_region
      %s25 = ssub.s32 512, 512
      %26 = vsyncadd [#allocation8], %s25
      %s27 = sshll.u32 [#allocation7], 4
      %s28 = int_to_ptr.vmem [resolvable:$true] %s27
      %33 = dma.hbm_to_vmem [thread:$0]  %s1, 512, %s28, [#allocation8], 256, 256, 16
    $region9: #{tpu_custom_call.1} parent=1 // pred_fallthru
      _
    // Predicated region
    $region10: #{tpu_custom_call.1} parent=1 // pred_check
      _
    $region11: #{tpu_custom_call.1} parent=1 // pred_check_branch
      %35 = sbr.rel (0) target = $region13
    $region12: #{tpu_custom_call.1} parent=1 // pred_region
      %s37 = ssub.s32 4224, 4224
      %38 = vsyncadd [#allocation8], %s37
      %s39 = sshll.u32 [#allocation9], 4
      %s40 = int_to_ptr.vmem [resolvable:$true] %s39
      %45 = dma.hbm_to_vmem [thread:$0]  %s2, 4224, %s40, [#allocation8], 128, 128, 8
    $region13: #{tpu_custom_call.1} parent=1 // pred_fallthru
      _
    // Predicated region
    $region14: #{tpu_custom_call.1} parent=1 // pred_check
      _
    $region15: #{tpu_custom_call.1} parent=1 // pred_check_branch
      %47 = sbr.rel (0) target = $region17
    $region16: #{tpu_custom_call.1} parent=1 // pred_region
      %48 = dma.done [#allocation5], 128
    $region17: #{tpu_custom_call.1} parent=1 // pred_fallthru
      _
    // Predicated region
    $region18: #{tpu_custom_call.1} parent=1 // pred_check
      _
    $region19: #{tpu_custom_call.1} parent=1 // pred_check_branch
      %50 = sbr.rel (0) target = $region21
    $region20: #{tpu_custom_call.1} parent=1 // pred_region
      %51 = dma.done [#allocation8], 512
    $region21: #{tpu_custom_call.1} parent=1 // pred_fallthru
      _
    // Predicated region
    $region22: #{tpu_custom_call.1} parent=1 // pred_check
      _
    $region23: #{tpu_custom_call.1} parent=1 // pred_check_branch
      %53 = sbr.rel (0) target = $region25
    $region24: #{tpu_custom_call.1} parent=1 // pred_region
      %54 = dma.done [#allocation8], 4224
    $region25: #{tpu_custom_call.1} parent=1 // pred_fallthru
      _
    // Predicated region
    $region26: #{tpu_custom_call.1} parent=1 // pred_check
      _
    $region27: #{tpu_custom_call.1} parent=1 // pred_check_branch
      %56 = sbr.rel target = $region29
    $region28: #{tpu_custom_call.1} parent=1 // pred_region
      %57 = sst [smem:[#allocation13]] [#allocation12]
      %58 = sst [smem:[#allocation14]] [#allocation11]
    $region29: #{tpu_custom_call.1} parent=1 // pred_fallthru
      _
    %60 = shalt.err (0)
    %s62 = sshll.u32 [#allocation2], 4
    %s63 = int_to_ptr.vmem [resolvable:$true] %s62
    %65 = dma.hbm_to_vmem [thread:$0]  %s3, 8192, %s63, [#allocation3]
    %v66 = vld [vmem:[#allocation4] sm:$0xff]
    %v67 = vld [vmem:[#allocation7] sm:$0xff]
    %v68 = vld [vmem:[#allocation7 + $0x8] sm:$0xff]
    %vm69 = vcmask 64512
    %v71 = vsel %vm69, %v66, 0
    %73 = vmatprep.subr.mxu0 0.0
    %74 = vmatpush1.msra.mxu0 0.0
    %75 = vmatprep.subr.mxu0 0.0
    %76 = vmatpush1.msra.mxu0 0.0
    %77 = vmatprep.subr.mxu0 0.0
    %78 = vmatpush1.msra.mxu0 0.0
    %79 = vmatprep.subr.mxu0 0.0
    %80 = vmatpush1.msra.mxu0 0.0
    %81 = vmatprep.subr.mxu0 0.0
    %82 = vmatpush1.msra.mxu0 0.0
    %83 = vmatprep.subr.mxu0 0.0
    %84 = vmatpush1.msra.mxu0 0.0
    %85 = vmatprep.subr.mxu0 0.0
    %86 = vmatpush1.msra.mxu0 0.0
    %87 = vmatprep.subr.mxu0 0.0
    %88 = vmatpush1.msra.mxu0 0.0
    %89 = vmatprep.subr.mxu0 0.0
    %90 = vmatpush1.msra.mxu0 0.0
    %91 = vmatprep.subr.mxu0 0.0
    %92 = vmatpush1.msra.mxu0 0.0
    %93 = vmatprep.subr.mxu0 0.0
    %94 = vmatpush1.msra.mxu0 0.0
    %95 = vmatprep.subr.mxu0 0.0
    %96 = vmatpush1.msra.mxu0 0.0
    %97 = vmatprep.subr.mxu0 0.0
    %98 = vmatpush1.msra.mxu0 0.0
    %99 = vmatprep.subr.mxu0 0.0
    %100 = vmatpush1.msra.mxu0 0.0
    %101 = vmatprep.subr.mxu0 0.0
    %102 = vmatpush1.msra.mxu0 0.0
    %103 = vmatprep.subr.mxu0 %v68
    %104 = vmatpush1.msra.mxu0 %v67
    %105 = vmatprep.subr.mxu0 0.0
    %106 = vmatpush2.msra.mxu0 0.0
    %107 = vmatprep.subr.mxu0 0.0
    %108 = vmatpush2.msra.mxu0 0.0
    %109 = vmatprep.subr.mxu0 0.0
    %110 = vmatpush2.msra.mxu0 0.0
    %111 = vmatprep.subr.mxu0 0.0
    %112 = vmatpush2.msra.mxu0 0.0
    %113 = vmatprep.subr.mxu0 0.0
    %114 = vmatpush2.msra.mxu0 0.0
    %115 = vmatprep.subr.mxu0 0.0
    %116 = vmatpush2.msra.mxu0 0.0
    %117 = vmatprep.subr.mxu0 0.0
    %118 = vmatpush2.msra.mxu0 0.0
    %119 = vmatprep.subr.mxu0 0.0
    %120 = vmatpush2.msra.mxu0 0.0
    %121 = vmatprep.subr.mxu0 0.0
    %122 = vmatpush2.msra.mxu0 0.0
    %123 = vmatprep.subr.mxu0 0.0
    %124 = vmatpush2.msra.mxu0 0.0
    %125 = vmatprep.subr.mxu0 0.0
    %126 = vmatpush2.msra.mxu0 0.0
    %127 = vmatprep.subr.mxu0 0.0
    %128 = vmatpush2.msra.mxu0 0.0
    %129 = vmatprep.subr.mxu0 0.0
    %130 = vmatpush2.msra.mxu0 0.0
    %131 = vmatprep.subr.mxu0 0.0
    %132 = vmatpush2.msra.mxu0 0.0
    %133 = vmatprep.subr.mxu0 0.0
    %134 = vmatpush2.msra.mxu0 0.0
    %135 = vmatprep.subr.mxu0 0.0
    %136 = vmatpush2.msra.mxu0 0.0
    %137 = vmatprep.mubr.f32.mxu0 0.0
    %138 = vmatmul.mubr.f32.gmra.mxu0 %v71
    %v139 = vpop.f32.mrf.mxu0
    %v140 = vadd.f32 0.0, %v139
    %v141 = vpop.f32.mrf.mxu0
    %v142 = vadd.f32 0.0, %v141
    %143 = vdwg.mxu0
    %s144 = scalar_lea.vmem [#allocation7], 16
    %v145 = vld [vmem:[%s144] ss:$8 sm:$0x3]
    %s146 = scalar_lea.vmem [#allocation7], 20
    %v147 = vld [vmem:[%s146] ss:$8 sm:$0x3]
    %v148 = vrot.slane %v140, 4
    %v149 = vadd.f32 %v140, %v148
    %v150 = vrot.slane %v149, 2
    %v151 = vadd.f32 %v149, %v150
    %v152 = vrot.slane %v151, 1
    %v153 = vadd.f32 %v151, %v152
    %v154 = vrot.slane %v142, 4
    %v155 = vadd.f32 %v142, %v154
    %v156 = vrot.slane %v155, 2
    %v157 = vadd.f32 %v155, %v156
    %v158 = vrot.slane %v157, 1
    %v159 = vadd.f32 %v157, %v158
    %v160 = vrcp.pop 8.0
    %v161 = vmul.f32 %v153, %v160
    %v162 = vmul.f32 %v159, %v160
    %v163 = vsub.f32 %v140, %v161
    %v164 = vsub.f32 %v142, %v162
    %v165 = vmul.f32 %v163, %v163
    %v166 = vmul.f32 %v164, %v164
    %v167 = vrot.slane %v165, 4
    %v168 = vadd.f32 %v165, %v167
    %v169 = vrot.slane %v168, 2
    %v170 = vadd.f32 %v168, %v169
    %v171 = vrot.slane %v170, 1
    %v172 = vadd.f32 %v170, %v171
    %v173 = vrot.slane %v166, 4
    %v174 = vadd.f32 %v166, %v173
    %v175 = vrot.slane %v174, 2
    %v176 = vadd.f32 %v174, %v175
    %v177 = vrot.slane %v176, 1
    %v178 = vadd.f32 %v176, %v177
    %v179 = vmul.f32 %v172, %v160
    %v180 = vmul.f32 %v178, %v160
    %v181 = vadd.f32 %v179, 1e-05
    %v182 = vadd.f32 %v180, 1e-05
    %v183 = vrsqrt.pop %v181
    %v184 = vrsqrt.pop %v182
    %v187 = vcombine.low %v183, %v184
    %v189 = vunpack.c.l.s4 1966171168
    %v190 = vunpack.c.0.s8 %v189
    %v191 = vlaneseq
    %v192 = vshrl.u32 %v191, 7
    %v193 = vsub.s32 %v190, %v192
    %v194 = vrot.slane %v187, %v193
    %v196 = vunpack.c.l.s4 1966171168
    %v197 = vunpack.c.0.s8 %v196
    %v198 = vlaneseq
    %v199 = vshrl.u32 %v198, 7
    %v200 = vsub.s32 %v197, %v199
    %v201 = vrot.slane %v194, %v200
    %v203 = vmul.f32 %v145, %v201
    %v205 = vlaneseq
    %v206 = vshrl.u32 %v205, 7
    %v207 = vsub.s32 0, %v206
    %v208 = vrot.slane %v203, %v207
    %v209 = vlaneseq
    %v210 = vshrl.u32 %v209, 7
    %v211 = vsub.s32 1, %v210
    %v212 = vrot.slane %v203, %v211
    %v215 = vmul.f32 %v161, %v208
    %v216 = vmul.f32 %v162, %v212
    %v219 = vcombine.low %v215, %v216
    %v221 = vunpack.c.l.s4 1966171168
    %v222 = vunpack.c.0.s8 %v221
    %v223 = vlaneseq
    %v224 = vshrl.u32 %v223, 7
    %v225 = vsub.s32 %v222, %v224
    %v226 = vrot.slane %v219, %v225
    %v228 = vunpack.c.l.s4 1966171168
    %v229 = vunpack.c.0.s8 %v228
    %v230 = vlaneseq
    %v231 = vshrl.u32 %v230, 7
    %v232 = vsub.s32 %v229, %v231
    %v233 = vrot.slane %v226, %v232
    %v235 = vsub.f32 %v147, %v233
    %v236 = vmul.f32 %v140, %v208
    %v237 = vmul.f32 %v142, %v212
    %v239 = vlaneseq
    %v240 = vshrl.u32 %v239, 7
    %v241 = vsub.s32 0, %v240
    %v242 = vrot.slane %v235, %v241
    %v243 = vlaneseq
    %v244 = vshrl.u32 %v243, 7
    %v245 = vsub.s32 1, %v244
    %v246 = vrot.slane %v235, %v245
    %v249 = vadd.f32 %v236, %v242
    %v250 = vadd.f32 %v237, %v246
    %v251 = vmax.f32 %v249, 0.0
    %v252 = vmax.f32 %v250, 0.0
    %s253 = smul.u32 8, 32
    %s254 = smul.u32 %s253, 2
    %s255 = sshll.u32 %s254, 4
    %256 = dma.done [#allocation3], %s255
    %s257 = scalar_lea.hbm %s3, 8192
    %s258 = scalar_lea.vmem [#allocation2], 512
    %s259 = scalar_lea.sflag [#allocation3], 1
    // Predicated region
    $region30: #{tpu_custom_call.1} parent=1 // pred_check
      _
    $region31: #{tpu_custom_call.1} parent=1 // pred_check_branch
      %261 = sbr.rel target = $region33
    $region32: #{tpu_custom_call.1} parent=1 // pred_region
      %262 = sst [smem:[#allocation13]] [#allocation16]
      %263 = sst [smem:[#allocation14]] [#allocation15]
    $region33: #{tpu_custom_call.1} parent=1 // pred_fallthru
      _
    %265 = shalt.err (0)
    %s267 = sshll.u32 %s258, 4
    %s268 = int_to_ptr.vmem [resolvable:$true] %s267
    %270 = dma.hbm_to_vmem [thread:$0]  %s257, 8192, %s268, %s259
    %v271 = vld [vmem:[#allocation2] sm:$0xff]
    %v272 = vld [vmem:[#allocation2 + $0x8] sm:$0xff]
    %v273 = vld [vmem:[#allocation2 + $0x10] sm:$0xff]
    %v274 = vld [vmem:[#allocation2 + $0x18] sm:$0xff]
    %v275 = vld [vmem:[#allocation2 + $0x20] sm:$0xff]
    %v276 = vld [vmem:[#allocation2 + $0x28] sm:$0xff]
    %v277 = vld [vmem:[#allocation2 + $0x30] sm:$0xff]
    %v278 = vld [vmem:[#allocation2 + $0x38] sm:$0xff]
    %v279 = vld [vmem:[#allocation2 + $0x40] sm:$0xff]
    %v280 = vld [vmem:[#allocation2 + $0x48] sm:$0xff]
    %v281 = vld [vmem:[#allocation2 + $0x50] sm:$0xff]
    %v282 = vld [vmem:[#allocation2 + $0x58] sm:$0xff]
    %v283 = vld [vmem:[#allocation2 + $0x60] sm:$0xff]
    %v284 = vld [vmem:[#allocation2 + $0x68] sm:$0xff]
    %v285 = vld [vmem:[#allocation2 + $0x70] sm:$0xff]
    %v286 = vld [vmem:[#allocation2 + $0x78] sm:$0xff]
    %v287 = vld [vmem:[#allocation2 + $0x80] sm:$0xff]
    %v288 = vld [vmem:[#allocation2 + $0x88] sm:$0xff]
    %v289 = vld [vmem:[#allocation2 + $0x90] sm:$0xff]
    %v290 = vld [vmem:[#allocation2 + $0x98] sm:$0xff]
    %v291 = vld [vmem:[#allocation2 + $0xa0] sm:$0xff]
    %v292 = vld [vmem:[#allocation2 + $0xa8] sm:$0xff]
    %v293 = vld [vmem:[#allocation2 + $0xb0] sm:$0xff]
    %v294 = vld [vmem:[#allocation2 + $0xb8] sm:$0xff]
    %v295 = vld [vmem:[#allocation2 + $0xc0] sm:$0xff]
    %v296 = vld [vmem:[#allocation2 + $0xc8] sm:$0xff]
    %v297 = vld [vmem:[#allocation2 + $0xd0] sm:$0xff]
    %v298 = vld [vmem:[#allocation2 + $0xd8] sm:$0xff]
    %v299 = vld [vmem:[#allocation2 + $0xe0] sm:$0xff]
    %v300 = vld [vmem:[#allocation2 + $0xe8] sm:$0xff]
    %v301 = vld [vmem:[#allocation2 + $0xf0] sm:$0xff]
    %v302 = vld [vmem:[#allocation2 + $0xf8] sm:$0xff]
    %v303 = vld [vmem:[#allocation2 + $0x100] sm:$0xff]
    %v304 = vld [vmem:[#allocation2 + $0x108] sm:$0xff]
    %v305 = vld [vmem:[#allocation2 + $0x110] sm:$0xff]
    %v306 = vld [vmem:[#allocation2 + $0x118] sm:$0xff]
    %v307 = vld [vmem:[#allocation2 + $0x120] sm:$0xff]
    %v308 = vld [vmem:[#allocation2 + $0x128] sm:$0xff]
    %v309 = vld [vmem:[#allocation2 + $0x130] sm:$0xff]
    %v310 = vld [vmem:[#allocation2 + $0x138] sm:$0xff]
    %v311 = vld [vmem:[#allocation2 + $0x140] sm:$0xff]
    %v312 = vld [vmem:[#allocation2 + $0x148] sm:$0xff]
    %v313 = vld [vmem:[#allocation2 + $0x150] sm:$0xff]
    %v314 = vld [vmem:[#allocation2 + $0x158] sm:$0xff]
    %v315 = vld [vmem:[#allocation2 + $0x160] sm:$0xff]
    %v316 = vld [vmem:[#allocation2 + $0x168] sm:$0xff]
    %v317 = vld [vmem:[#allocation2 + $0x170] sm:$0xff]
    %v318 = vld [vmem:[#allocation2 + $0x178] sm:$0xff]
    %v319 = vld [vmem:[#allocation2 + $0x180] sm:$0xff]
    %v320 = vld [vmem:[#allocation2 + $0x188] sm:$0xff]
    %v321 = vld [vmem:[#allocation2 + $0x190] sm:$0xff]
    %v322 = vld [vmem:[#allocation2 + $0x198] sm:$0xff]
    %v323 = vld [vmem:[#allocation2 + $0x1a0] sm:$0xff]
    %v324 = vld [vmem:[#allocation2 + $0x1a8] sm:$0xff]
    %v325 = vld [vmem:[#allocation2 + $0x1b0] sm:$0xff]
    %v326 = vld [vmem:[#allocation2 + $0x1b8] sm:$0xff]
    %v327 = vld [vmem:[#allocation2 + $0x1c0] sm:$0xff]
    %v328 = vld [vmem:[#allocation2 + $0x1c8] sm:$0xff]
    %v329 = vld [vmem:[#allocation2 + $0x1d0] sm:$0xff]
    %v330 = vld [vmem:[#allocation2 + $0x1d8] sm:$0xff]
    %v331 = vld [vmem:[#allocation2 + $0x1e0] sm:$0xff]
    %v332 = vld [vmem:[#allocation2 + $0x1e8] sm:$0xff]
    %v333 = vld [vmem:[#allocation2 + $0x1f0] sm:$0xff]
    %v334 = vld [vmem:[#allocation2 + $0x1f8] sm:$0xff]
    %335 = vmatprep.subr.mxu0 %v302
    %336 = vmatpush1.msra.mxu0 %v301
    %337 = vmatprep.subr.mxu0 %v300
    %338 = vmatpush1.msra.mxu0 %v299
    %339 = vmatprep.subr.mxu0 %v298
    %340 = vmatpush1.msra.mxu0 %v297
    %341 = vmatprep.subr.mxu0 %v296
    %342 = vmatpush1.msra.mxu0 %v295
    %343 = vmatprep.subr.mxu0 %v294
    %344 = vmatpush1.msra.mxu0 %v293
    %345 = vmatprep.subr.mxu0 %v292
    %346 = vmatpush1.msra.mxu0 %v291
    %347 = vmatprep.subr.mxu0 %v290
    %348 = vmatpush1.msra.mxu0 %v289
    %349 = vmatprep.subr.mxu0 %v288
    %350 = vmatpush1.msra.mxu0 %v287
    %351 = vmatprep.subr.mxu0 %v286
    %352 = vmatpush1.msra.mxu0 %v285
    %353 = vmatprep.subr.mxu0 %v284
    %354 = vmatpush1.msra.mxu0 %v283
    %355 = vmatprep.subr.mxu0 %v282
    %356 = vmatpush1.msra.mxu0 %v281
    %357 = vmatprep.subr.mxu0 %v280
    %358 = vmatpush1.msra.mxu0 %v279
    %359 = vmatprep.subr.mxu0 %v278
    %360 = vmatpush1.msra.mxu0 %v277
    %361 = vmatprep.subr.mxu0 %v276
    %362 = vmatpush1.msra.mxu0 %v275
    %363 = vmatprep.subr.mxu0 %v274
    %364 = vmatpush1.msra.mxu0 %v273
    %365 = vmatprep.subr.mxu0 %v272
    %366 = vmatpush1.msra.mxu0 %v271
    %367 = vmatprep.subr.mxu0 %v334
    %368 = vmatpush2.msra.mxu0 %v333
    %369 = vmatprep.subr.mxu0 %v332
    %370 = vmatpush2.msra.mxu0 %v331
    %371 = vmatprep.subr.mxu0 %v330
    %372 = vmatpush2.msra.mxu0 %v329
    %373 = vmatprep.subr.mxu0 %v328
    %374 = vmatpush2.msra.mxu0 %v327
    %375 = vmatprep.subr.mxu0 %v326
    %376 = vmatpush2.msra.mxu0 %v325
    %377 = vmatprep.subr.mxu0 %v324
    %378 = vmatpush2.msra.mxu0 %v323
    %379 = vmatprep.subr.mxu0 %v322
    %380 = vmatpush2.msra.mxu0 %v321
    %381 = vmatprep.subr.mxu0 %v320
    %382 = vmatpush2.msra.mxu0 %v319
    %383 = vmatprep.subr.mxu0 %v318
    %384 = vmatpush2.msra.mxu0 %v317
    %385 = vmatprep.subr.mxu0 %v316
    %386 = vmatpush2.msra.mxu0 %v315
    %387 = vmatprep.subr.mxu0 %v314
    %388 = vmatpush2.msra.mxu0 %v313
    %389 = vmatprep.subr.mxu0 %v312
    %390 = vmatpush2.msra.mxu0 %v311
    %391 = vmatprep.subr.mxu0 %v310
    %392 = vmatpush2.msra.mxu0 %v309
    %393 = vmatprep.subr.mxu0 %v308
    %394 = vmatpush2.msra.mxu0 %v307
    %395 = vmatprep.subr.mxu0 %v306
    %396 = vmatpush2.msra.mxu0 %v305
    %397 = vmatprep.subr.mxu0 %v304
    %398 = vmatpush2.msra.mxu0 %v303
    %399 = vmatprep.mubr.f32.mxu0 %v252
    %400 = vmatmul.mubr.f32.gmra.mxu0 %v251
    %v401 = vpop.f32.mrf.mxu0
    %v402 = vadd.f32 0.0, %v401
    %v403 = vpop.f32.mrf.mxu0
    %v404 = vadd.f32 0.0, %v403
    %405 = vdwg.mxu0
    %s406 = scalar_lea.vmem [#allocation7], 17
    %v407 = vld [vmem:[%s406] ss:$8 sm:$0x3]
    %s408 = scalar_lea.vmem [#allocation7], 21
    %v409 = vld [vmem:[%s408] ss:$8 sm:$0x3]
    %v410 = vrot.slane %v402, 4
    %v411 = vadd.f32 %v402, %v410
    %v412 = vrot.slane %v411, 2
    %v413 = vadd.f32 %v411, %v412
    %v414 = vrot.slane %v413, 1
    %v415 = vadd.f32 %v413, %v414
    %v416 = vrot.slane %v404, 4
    %v417 = vadd.f32 %v404, %v416
    %v418 = vrot.slane %v417, 2
    %v419 = vadd.f32 %v417, %v418
    %v420 = vrot.slane %v419, 1
    %v421 = vadd.f32 %v419, %v420
    %v422 = vmul.f32 %v415, %v160
    %v423 = vmul.f32 %v421, %v160
    %v424 = vsub.f32 %v402, %v422
    %v425 = vsub.f32 %v404, %v423
    %v426 = vmul.f32 %v424, %v424
    %v427 = vmul.f32 %v425, %v425
    %v428 = vrot.slane %v426, 4
    %v429 = vadd.f32 %v426, %v428
    %v430 = vrot.slane %v429, 2
    %v431 = vadd.f32 %v429, %v430
    %v432 = vrot.slane %v431, 1
    %v433 = vadd.f32 %v431, %v432
    %v434 = vrot.slane %v427, 4
    %v435 = vadd.f32 %v427, %v434
    %v436 = vrot.slane %v435, 2
    %v437 = vadd.f32 %v435, %v436
    %v438 = vrot.slane %v437, 1
    %v439 = vadd.f32 %v437, %v438
    %v440 = vmul.f32 %v433, %v160
    %v441 = vmul.f32 %v439, %v160
    %v442 = vadd.f32 %v440, 1e-05
    %v443 = vadd.f32 %v441, 1e-05
    %v444 = vrsqrt.pop %v442
    %v445 = vrsqrt.pop %v443
    %v448 = vcombine.low %v444, %v445
    %v450 = vunpack.c.l.s4 1966171168
    %v451 = vunpack.c.0.s8 %v450
    %v452 = vlaneseq
    %v453 = vshrl.u32 %v452, 7
    %v454 = vsub.s32 %v451, %v453
    %v455 = vrot.slane %v448, %v454
    %v457 = vunpack.c.l.s4 1966171168
    %v458 = vunpack.c.0.s8 %v457
    %v459 = vlaneseq
    %v460 = vshrl.u32 %v459, 7
    %v461 = vsub.s32 %v458, %v460
    %v462 = vrot.slane %v455, %v461
    %v464 = vmul.f32 %v407, %v462
    %v466 = vlaneseq
    %v467 = vshrl.u32 %v466, 7
    %v468 = vsub.s32 0, %v467
    %v469 = vrot.slane %v464, %v468
    %v470 = vlaneseq
    %v471 = vshrl.u32 %v470, 7
    %v472 = vsub.s32 1, %v471
    %v473 = vrot.slane %v464, %v472
    %v476 = vmul.f32 %v422, %v469
    %v477 = vmul.f32 %v423, %v473
    %v480 = vcombine.low %v476, %v477
    %v482 = vunpack.c.l.s4 1966171168
    %v483 = vunpack.c.0.s8 %v482
    %v484 = vlaneseq
    %v485 = vshrl.u32 %v484, 7
    %v486 = vsub.s32 %v483, %v485
    %v487 = vrot.slane %v480, %v486
    %v489 = vunpack.c.l.s4 1966171168
    %v490 = vunpack.c.0.s8 %v489
    %v491 = vlaneseq
    %v492 = vshrl.u32 %v491, 7
    %v493 = vsub.s32 %v490, %v492
    %v494 = vrot.slane %v487, %v493
    %v496 = vsub.f32 %v409, %v494
    %v497 = vmul.f32 %v402, %v469
    %v498 = vmul.f32 %v404, %v473
    %v500 = vlaneseq
    %v501 = vshrl.u32 %v500, 7
    %v502 = vsub.s32 0, %v501
    %v503 = vrot.slane %v496, %v502
    %v504 = vlaneseq
    %v505 = vshrl.u32 %v504, 7
    %v506 = vsub.s32 1, %v505
    %v507 = vrot.slane %v496, %v506
    %v510 = vadd.f32 %v497, %v503
    %v511 = vadd.f32 %v498, %v507
    %v512 = vmax.f32 %v510, 0.0
    %v513 = vmax.f32 %v511, 0.0
    %s514 = sshll.u32 %s254, 4
    %515 = dma.done %s259, %s514
    %s516 = scalar_lea.hbm %s3, 16384
    // Predicated region
    $region34: #{tpu_custom_call.1} parent=1 // pred_check
      _
    $region35: #{tpu_custom_call.1} parent=1 // pred_check_branch
      %518 = sbr.rel target = $region37
    $region36: #{tpu_custom_call.1} parent=1 // pred_region
      %519 = sst [smem:[#allocation13]] [#allocation18]
      %520 = sst [smem:[#allocation14]] [#allocation17]
    $region37: #{tpu_custom_call.1} parent=1 // pred_fallthru
      _
    %522 = shalt.err (0)
    %s524 = sshll.u32 [#allocation2], 4
    %s525 = int_to_ptr.vmem [resolvable:$true] %s524
    %527 = dma.hbm_to_vmem [thread:$0]  %s516, 8192, %s525, [#allocation3]
    %v528 = vld [vmem:[%s258] sm:$0xff]
    %v529 = vld [vmem:[%s258 + $0x8] sm:$0xff]
    %v530 = vld [vmem:[%s258 + $0x10] sm:$0xff]
    %v531 = vld [vmem:[%s258 + $0x18] sm:$0xff]
    %v532 = vld [vmem:[%s258 + $0x20] sm:$0xff]
    %v533 = vld [vmem:[%s258 + $0x28] sm:$0xff]
    %v534 = vld [vmem:[%s258 + $0x30] sm:$0xff]
    %v535 = vld [vmem:[%s258 + $0x38] sm:$0xff]
    %v536 = vld [vmem:[%s258 + $0x40] sm:$0xff]
    %v537 = vld [vmem:[%s258 + $0x48] sm:$0xff]
    %v538 = vld [vmem:[%s258 + $0x50] sm:$0xff]
    %v539 = vld [vmem:[%s258 + $0x58] sm:$0xff]
    %v540 = vld [vmem:[%s258 + $0x60] sm:$0xff]
    %v541 = vld [vmem:[%s258 + $0x68] sm:$0xff]
    %v542 = vld [vmem:[%s258 + $0x70] sm:$0xff]
    %v543 = vld [vmem:[%s258 + $0x78] sm:$0xff]
    %v544 = vld [vmem:[%s258 + $0x80] sm:$0xff]
    %v545 = vld [vmem:[%s258 + $0x88] sm:$0xff]
    %v546 = vld [vmem:[%s258 + $0x90] sm:$0xff]
    %v547 = vld [vmem:[%s258 + $0x98] sm:$0xff]
    %v548 = vld [vmem:[%s258 + $0xa0] sm:$0xff]
    %v549 = vld [vmem:[%s258 + $0xa8] sm:$0xff]
    %v550 = vld [vmem:[%s258 + $0xb0] sm:$0xff]
    %v551 = vld [vmem:[%s258 + $0xb8] sm:$0xff]
    %v552 = vld [vmem:[%s258 + $0xc0] sm:$0xff]
    %v553 = vld [vmem:[%s258 + $0xc8] sm:$0xff]
    %v554 = vld [vmem:[%s258 + $0xd0] sm:$0xff]
    %v555 = vld [vmem:[%s258 + $0xd8] sm:$0xff]
    %v556 = vld [vmem:[%s258 + $0xe0] sm:$0xff]
    %v557 = vld [vmem:[%s258 + $0xe8] sm:$0xff]
    %v558 = vld [vmem:[%s258 + $0xf0] sm:$0xff]
    %v559 = vld [vmem:[%s258 + $0xf8] sm:$0xff]
    %v560 = vld [vmem:[%s258 + $0x100] sm:$0xff]
    %v561 = vld [vmem:[%s258 + $0x108] sm:$0xff]
    %v562 = vld [vmem:[%s258 + $0x110] sm:$0xff]
    %v563 = vld [vmem:[%s258 + $0x118] sm:$0xff]
    %v564 = vld [vmem:[%s258 + $0x120] sm:$0xff]
    %v565 = vld [vmem:[%s258 + $0x128] sm:$0xff]
    %v566 = vld [vmem:[%s258 + $0x130] sm:$0xff]
    %v567 = vld [vmem:[%s258 + $0x138] sm:$0xff]
    %v568 = vld [vmem:[%s258 + $0x140] sm:$0xff]
    %v569 = vld [vmem:[%s258 + $0x148] sm:$0xff]
    %v570 = vld [vmem:[%s258 + $0x150] sm:$0xff]
    %v571 = vld [vmem:[%s258 + $0x158] sm:$0xff]
    %v572 = vld [vmem:[%s258 + $0x160] sm:$0xff]
    %v573 = vld [vmem:[%s258 + $0x168] sm:$0xff]
    %v574 = vld [vmem:[%s258 + $0x170] sm:$0xff]
    %v575 = vld [vmem:[%s258 + $0x178] sm:$0xff]
    %v576 = vld [vmem:[%s258 + $0x180] sm:$0xff]
    %v577 = vld [vmem:[%s258 + $0x188] sm:$0xff]
    %v578 = vld [vmem:[%s258 + $0x190] sm:$0xff]
    %v579 = vld [vmem:[%s258 + $0x198] sm:$0xff]
    %v580 = vld [vmem:[%s258 + $0x1a0] sm:$0xff]
    %v581 = vld [vmem:[%s258 + $0x1a8] sm:$0xff]
    %v582 = vld [vmem:[%s258 + $0x1b0] sm:$0xff]
    %v583 = vld [vmem:[%s258 + $0x1b8] sm:$0xff]
    %v584 = vld [vmem:[%s258 + $0x1c0] sm:$0xff]
    %v585 = vld [vmem:[%s258 + $0x1c8] sm:$0xff]
    %v586 = vld [vmem:[%s258 + $0x1d0] sm:$0xff]
    %v587 = vld [vmem:[%s258 + $0x1d8] sm:$0xff]
    %v588 = vld [vmem:[%s258 + $0x1e0] sm:$0xff]
    %v589 = vld [vmem:[%s258 + $0x1e8] sm:$0xff]
    %v590 = vld [vmem:[%s258 + $0x1f0] sm:$0xff]
    %v591 = vld [vmem:[%s258 + $0x1f8] sm:$0xff]
    %592 = vmatprep.subr.mxu0 %v559
    %593 = vmatpush1.msra.mxu0 %v558
    %594 = vmatprep.subr.mxu0 %v557
    %595 = vmatpush1.msra.mxu0 %v556
    %596 = vmatprep.subr.mxu0 %v555
    %597 = vmatpush1.msra.mxu0 %v554
    %598 = vmatprep.subr.mxu0 %v553
    %599 = vmatpush1.msra.mxu0 %v552
    %600 = vmatprep.subr.mxu0 %v551
    %601 = vmatpush1.msra.mxu0 %v550
    %602 = vmatprep.subr.mxu0 %v549
    %603 = vmatpush1.msra.mxu0 %v548
    %604 = vmatprep.subr.mxu0 %v547
    %605 = vmatpush1.msra.mxu0 %v546
    %606 = vmatprep.subr.mxu0 %v545
    %607 = vmatpush1.msra.mxu0 %v544
    %608 = vmatprep.subr.mxu0 %v543
    %609 = vmatpush1.msra.mxu0 %v542
    %610 = vmatprep.subr.mxu0 %v541
    %611 = vmatpush1.msra.mxu0 %v540
    %612 = vmatprep.subr.mxu0 %v539
    %613 = vmatpush1.msra.mxu0 %v538
    %614 = vmatprep.subr.mxu0 %v537
    %615 = vmatpush1.msra.mxu0 %v536
    %616 = vmatprep.subr.mxu0 %v535
    %617 = vmatpush1.msra.mxu0 %v534
    %618 = vmatprep.subr.mxu0 %v533
    %619 = vmatpush1.msra.mxu0 %v532
    %620 = vmatprep.subr.mxu0 %v531
    %621 = vmatpush1.msra.mxu0 %v530
    %622 = vmatprep.subr.mxu0 %v529
    %623 = vmatpush1.msra.mxu0 %v528
    %624 = vmatprep.subr.mxu0 %v591
    %625 = vmatpush2.msra.mxu0 %v590
    %626 = vmatprep.subr.mxu0 %v589
    %627 = vmatpush2.msra.mxu0 %v588
    %628 = vmatprep.subr.mxu0 %v587
    %629 = vmatpush2.msra.mxu0 %v586
    %630 = vmatprep.subr.mxu0 %v585
    %631 = vmatpush2.msra.mxu0 %v584
    %632 = vmatprep.subr.mxu0 %v583
    %633 = vmatpush2.msra.mxu0 %v582
    %634 = vmatprep.subr.mxu0 %v581
    %635 = vmatpush2.msra.mxu0 %v580
    %636 = vmatprep.subr.mxu0 %v579
    %637 = vmatpush2.msra.mxu0 %v578
    %638 = vmatprep.subr.mxu0 %v577
    %639 = vmatpush2.msra.mxu0 %v576
    %640 = vmatprep.subr.mxu0 %v575
    %641 = vmatpush2.msra.mxu0 %v574
    %642 = vmatprep.subr.mxu0 %v573
    %643 = vmatpush2.msra.mxu0 %v572
    %644 = vmatprep.subr.mxu0 %v571
    %645 = vmatpush2.msra.mxu0 %v570
    %646 = vmatprep.subr.mxu0 %v569
    %647 = vmatpush2.msra.mxu0 %v568
    %648 = vmatprep.subr.mxu0 %v567
    %649 = vmatpush2.msra.mxu0 %v566
    %650 = vmatprep.subr.mxu0 %v565
    %651 = vmatpush2.msra.mxu0 %v564
    %652 = vmatprep.subr.mxu0 %v563
    %653 = vmatpush2.msra.mxu0 %v562
    %654 = vmatprep.subr.mxu0 %v561
    %655 = vmatpush2.msra.mxu0 %v560
    %656 = vmatprep.mubr.f32.mxu0 %v513
    %657 = vmatmul.mubr.f32.gmra.mxu0 %v512
    %v658 = vpop.f32.mrf.mxu0
    %v659 = vadd.f32 0.0, %v658
    %v660 = vpop.f32.mrf.mxu0
    %v661 = vadd.f32 0.0, %v660
    %662 = vdwg.mxu0
    %s663 = scalar_lea.vmem [#allocation7], 18
    %v664 = vld [vmem:[%s663] ss:$8 sm:$0x3]
    %s665 = scalar_lea.vmem [#allocation7], 22
    %v666 = vld [vmem:[%s665] ss:$8 sm:$0x3]
    %v667 = vrot.slane %v659, 4
    %v668 = vadd.f32 %v659, %v667
    %v669 = vrot.slane %v668, 2
    %v670 = vadd.f32 %v668, %v669
    %v671 = vrot.slane %v670, 1
    %v672 = vadd.f32 %v670, %v671
    %v673 = vrot.slane %v661, 4
    %v674 = vadd.f32 %v661, %v673
    %v675 = vrot.slane %v674, 2
    %v676 = vadd.f32 %v674, %v675
    %v677 = vrot.slane %v676, 1
    %v678 = vadd.f32 %v676, %v677
    %v679 = vmul.f32 %v672, %v160
    %v680 = vmul.f32 %v678, %v160
    %v681 = vsub.f32 %v659, %v679
    %v682 = vsub.f32 %v661, %v680
    %v683 = vmul.f32 %v681, %v681
    %v684 = vmul.f32 %v682, %v682
    %v685 = vrot.slane %v683, 4
    %v686 = vadd.f32 %v683, %v685
    %v687 = vrot.slane %v686, 2
    %v688 = vadd.f32 %v686, %v687
    %v689 = vrot.slane %v688, 1
    %v690 = vadd.f32 %v688, %v689
    %v691 = vrot.slane %v684, 4
    %v692 = vadd.f32 %v684, %v691
    %v693 = vrot.slane %v692, 2
    %v694 = vadd.f32 %v692, %v693
    %v695 = vrot.slane %v694, 1
    %v696 = vadd.f32 %v694, %v695
    %v697 = vmul.f32 %v690, %v160
    %v698 = vmul.f32 %v696, %v160
    %v699 = vadd.f32 %v697, 1e-05
    %v700 = vadd.f32 %v698, 1e-05
    %v701 = vrsqrt.pop %v699
    %v702 = vrsqrt.pop %v700
    %v705 = vcombine.low %v701, %v702
    %v707 = vunpack.c.l.s4 1966171168
    %v708 = vunpack.c.0.s8 %v707
    %v709 = vlaneseq
    %v710 = vshrl.u32 %v709, 7
    %v711 = vsub.s32 %v708, %v710
    %v712 = vrot.slane %v705, %v711
    %v714 = vunpack.c.l.s4 1966171168
    %v715 = vunpack.c.0.s8 %v714
    %v716 = vlaneseq
    %v717 = vshrl.u32 %v716, 7
    %v718 = vsub.s32 %v715, %v717
    %v719 = vrot.slane %v712, %v718
    %v721 = vmul.f32 %v664, %v719
    %v723 = vlaneseq
    %v724 = vshrl.u32 %v723, 7
    %v725 = vsub.s32 0, %v724
    %v726 = vrot.slane %v721, %v725
    %v727 = vlaneseq
    %v728 = vshrl.u32 %v727, 7
    %v729 = vsub.s32 1, %v728
    %v730 = vrot.slane %v721, %v729
    %v733 = vmul.f32 %v679, %v726
    %v734 = vmul.f32 %v680, %v730
    %v737 = vcombine.low %v733, %v734
    %v739 = vunpack.c.l.s4 1966171168
    %v740 = vunpack.c.0.s8 %v739
    %v741 = vlaneseq
    %v742 = vshrl.u32 %v741, 7
    %v743 = vsub.s32 %v740, %v742
    %v744 = vrot.slane %v737, %v743
    %v746 = vunpack.c.l.s4 1966171168
    %v747 = vunpack.c.0.s8 %v746
    %v748 = vlaneseq
    %v749 = vshrl.u32 %v748, 7
    %v750 = vsub.s32 %v747, %v749
    %v751 = vrot.slane %v744, %v750
    %v753 = vsub.f32 %v666, %v751
    %v754 = vmul.f32 %v659, %v726
    %v755 = vmul.f32 %v661, %v730
    %v757 = vlaneseq
    %v758 = vshrl.u32 %v757, 7
    %v759 = vsub.s32 0, %v758
    %v760 = vrot.slane %v753, %v759
    %v761 = vlaneseq
    %v762 = vshrl.u32 %v761, 7
    %v763 = vsub.s32 1, %v762
    %v764 = vrot.slane %v753, %v763
    %v767 = vadd.f32 %v754, %v760
    %v768 = vadd.f32 %v755, %v764
    %v769 = vmax.f32 %v767, 0.0
    %v770 = vmax.f32 %v768, 0.0
    %s771 = sshll.u32 %s254, 4
    %772 = dma.done [#allocation3], %s771
    %v773 = vld [vmem:[#allocation2] sm:$0xff]
    %v774 = vld [vmem:[#allocation2 + $0x8] sm:$0xff]
    %v775 = vld [vmem:[#allocation2 + $0x10] sm:$0xff]
    %v776 = vld [vmem:[#allocation2 + $0x18] sm:$0xff]
    %v777 = vld [vmem:[#allocation2 + $0x20] sm:$0xff]
    %v778 = vld [vmem:[#allocation2 + $0x28] sm:$0xff]
    %v779 = vld [vmem:[#allocation2 + $0x30] sm:$0xff]
    %v780 = vld [vmem:[#allocation2 + $0x38] sm:$0xff]
    %v781 = vld [vmem:[#allocation2 + $0x40] sm:$0xff]
    %v782 = vld [vmem:[#allocation2 + $0x48] sm:$0xff]
    %v783 = vld [vmem:[#allocation2 + $0x50] sm:$0xff]
    %v784 = vld [vmem:[#allocation2 + $0x58] sm:$0xff]
    %v785 = vld [vmem:[#allocation2 + $0x60] sm:$0xff]
    %v786 = vld [vmem:[#allocation2 + $0x68] sm:$0xff]
    %v787 = vld [vmem:[#allocation2 + $0x70] sm:$0xff]
    %v788 = vld [vmem:[#allocation2 + $0x78] sm:$0xff]
    %v789 = vld [vmem:[#allocation2 + $0x80] sm:$0xff]
    %v790 = vld [vmem:[#allocation2 + $0x88] sm:$0xff]
    %v791 = vld [vmem:[#allocation2 + $0x90] sm:$0xff]
    %v792 = vld [vmem:[#allocation2 + $0x98] sm:$0xff]
    %v793 = vld [vmem:[#allocation2 + $0xa0] sm:$0xff]
    %v794 = vld [vmem:[#allocation2 + $0xa8] sm:$0xff]
    %v795 = vld [vmem:[#allocation2 + $0xb0] sm:$0xff]
    %v796 = vld [vmem:[#allocation2 + $0xb8] sm:$0xff]
    %v797 = vld [vmem:[#allocation2 + $0xc0] sm:$0xff]
    %v798 = vld [vmem:[#allocation2 + $0xc8] sm:$0xff]
    %v799 = vld [vmem:[#allocation2 + $0xd0] sm:$0xff]
    %v800 = vld [vmem:[#allocation2 + $0xd8] sm:$0xff]
    %v801 = vld [vmem:[#allocation2 + $0xe0] sm:$0xff]
    %v802 = vld [vmem:[#allocation2 + $0xe8] sm:$0xff]
    %v803 = vld [vmem:[#allocation2 + $0xf0] sm:$0xff]
    %v804 = vld [vmem:[#allocation2 + $0xf8] sm:$0xff]
    %v805 = vld [vmem:[#allocation2 + $0x100] sm:$0xff]
    %v806 = vld [vmem:[#allocation2 + $0x108] sm:$0xff]
    %v807 = vld [vmem:[#allocation2 + $0x110] sm:$0xff]
    %v808 = vld [vmem:[#allocation2 + $0x118] sm:$0xff]
    %v809 = vld [vmem:[#allocation2 + $0x120] sm:$0xff]
    %v810 = vld [vmem:[#allocation2 + $0x128] sm:$0xff]
    %v811 = vld [vmem:[#allocation2 + $0x130] sm:$0xff]
    %v812 = vld [vmem:[#allocation2 + $0x138] sm:$0xff]
    %v813 = vld [vmem:[#allocation2 + $0x140] sm:$0xff]
    %v814 = vld [vmem:[#allocation2 + $0x148] sm:$0xff]
    %v815 = vld [vmem:[#allocation2 + $0x150] sm:$0xff]
    %v816 = vld [vmem:[#allocation2 + $0x158] sm:$0xff]
    %v817 = vld [vmem:[#allocation2 + $0x160] sm:$0xff]
    %v818 = vld [vmem:[#allocation2 + $0x168] sm:$0xff]
    %v819 = vld [vmem:[#allocation2 + $0x170] sm:$0xff]
    %v820 = vld [vmem:[#allocation2 + $0x178] sm:$0xff]
    %v821 = vld [vmem:[#allocation2 + $0x180] sm:$0xff]
    %v822 = vld [vmem:[#allocation2 + $0x188] sm:$0xff]
    %v823 = vld [vmem:[#allocation2 + $0x190] sm:$0xff]
    %v824 = vld [vmem:[#allocation2 + $0x198] sm:$0xff]
    %v825 = vld [vmem:[#allocation2 + $0x1a0] sm:$0xff]
    %v826 = vld [vmem:[#allocation2 + $0x1a8] sm:$0xff]
    %v827 = vld [vmem:[#allocation2 + $0x1b0] sm:$0xff]
    %v828 = vld [vmem:[#allocation2 + $0x1b8] sm:$0xff]
    %v829 = vld [vmem:[#allocation2 + $0x1c0] sm:$0xff]
    %v830 = vld [vmem:[#allocation2 + $0x1c8] sm:$0xff]
    %v831 = vld [vmem:[#allocation2 + $0x1d0] sm:$0xff]
    %v832 = vld [vmem:[#allocation2 + $0x1d8] sm:$0xff]
    %v833 = vld [vmem:[#allocation2 + $0x1e0] sm:$0xff]
    %v834 = vld [vmem:[#allocation2 + $0x1e8] sm:$0xff]
    %v835 = vld [vmem:[#allocation2 + $0x1f0] sm:$0xff]
    %v836 = vld [vmem:[#allocation2 + $0x1f8] sm:$0xff]
    %837 = vmatprep.subr.mxu0 %v804
    %838 = vmatpush1.msra.mxu0 %v803
    %839 = vmatprep.subr.mxu0 %v802
    %840 = vmatpush1.msra.mxu0 %v801
    %841 = vmatprep.subr.mxu0 %v800
    %842 = vmatpush1.msra.mxu0 %v799
    %843 = vmatprep.subr.mxu0 %v798
    %844 = vmatpush1.msra.mxu0 %v797
    %845 = vmatprep.subr.mxu0 %v796
    %846 = vmatpush1.msra.mxu0 %v795
    %847 = vmatprep.subr.mxu0 %v794
    %848 = vmatpush1.msra.mxu0 %v793
    %849 = vmatprep.subr.mxu0 %v792
    %850 = vmatpush1.msra.mxu0 %v791
    %851 = vmatprep.subr.mxu0 %v790
    %852 = vmatpush1.msra.mxu0 %v789
    %853 = vmatprep.subr.mxu0 %v788
    %854 = vmatpush1.msra.mxu0 %v787
    %855 = vmatprep.subr.mxu0 %v786
    %856 = vmatpush1.msra.mxu0 %v785
    %857 = vmatprep.subr.mxu0 %v784
    %858 = vmatpush1.msra.mxu0 %v783
    %859 = vmatprep.subr.mxu0 %v782
    %860 = vmatpush1.msra.mxu0 %v781
    %861 = vmatprep.subr.mxu0 %v780
    %862 = vmatpush1.msra.mxu0 %v779
    %863 = vmatprep.subr.mxu0 %v778
    %864 = vmatpush1.msra.mxu0 %v777
    %865 = vmatprep.subr.mxu0 %v776
    %866 = vmatpush1.msra.mxu0 %v775
    %867 = vmatprep.subr.mxu0 %v774
    %868 = vmatpush1.msra.mxu0 %v773
    %869 = vmatprep.subr.mxu0 %v836
    %870 = vmatpush2.msra.mxu0 %v835
    %871 = vmatprep.subr.mxu0 %v834
    %872 = vmatpush2.msra.mxu0 %v833
    %873 = vmatprep.subr.mxu0 %v832
    %874 = vmatpush2.msra.mxu0 %v831
    %875 = vmatprep.subr.mxu0 %v830
    %876 = vmatpush2.msra.mxu0 %v829
    %877 = vmatprep.subr.mxu0 %v828
    %878 = vmatpush2.msra.mxu0 %v827
    %879 = vmatprep.subr.mxu0 %v826
    %880 = vmatpush2.msra.mxu0 %v825
    %881 = vmatprep.subr.mxu0 %v824
    %882 = vmatpush2.msra.mxu0 %v823
    %883 = vmatprep.subr.mxu0 %v822
    %884 = vmatpush2.msra.mxu0 %v821
    %885 = vmatprep.subr.mxu0 %v820
    %886 = vmatpush2.msra.mxu0 %v819
    %887 = vmatprep.subr.mxu0 %v818
    %888 = vmatpush2.msra.mxu0 %v817
    %889 = vmatprep.subr.mxu0 %v816
    %890 = vmatpush2.msra.mxu0 %v815
    %891 = vmatprep.subr.mxu0 %v814
    %892 = vmatpush2.msra.mxu0 %v813
    %893 = vmatprep.subr.mxu0 %v812
    %894 = vmatpush2.msra.mxu0 %v811
    %895 = vmatprep.subr.mxu0 %v810
    %896 = vmatpush2.msra.mxu0 %v809
    %897 = vmatprep.subr.mxu0 %v808
    %898 = vmatpush2.msra.mxu0 %v807
    %899 = vmatprep.subr.mxu0 %v806
    %900 = vmatpush2.msra.mxu0 %v805
    %901 = vmatprep.mubr.f32.mxu0 %v770
    %902 = vmatmul.mubr.f32.gmra.mxu0 %v769
    %v903 = vpop.f32.mrf.mxu0
    %v904 = vadd.f32 0.0, %v903
    %v905 = vpop.f32.mrf.mxu0
    %v906 = vadd.f32 0.0, %v905
    %907 = vdwg.mxu0
    %s908 = scalar_lea.vmem [#allocation7], 19
    %v909 = vld [vmem:[%s908] ss:$8 sm:$0x3]
    %s910 = scalar_lea.vmem [#allocation7], 23
    %v911 = vld [vmem:[%s910] ss:$8 sm:$0x3]
    %v912 = vrot.slane %v904, 4
    %v913 = vadd.f32 %v904, %v912
    %v914 = vrot.slane %v913, 2
    %v915 = vadd.f32 %v913, %v914
    %v916 = vrot.slane %v915, 1
    %v917 = vadd.f32 %v915, %v916
    %v918 = vrot.slane %v906, 4
    %v919 = vadd.f32 %v906, %v918
    %v920 = vrot.slane %v919, 2
    %v921 = vadd.f32 %v919, %v920
    %v922 = vrot.slane %v921, 1
    %v923 = vadd.f32 %v921, %v922
    %v924 = vmul.f32 %v917, %v160
    %v925 = vmul.f32 %v923, %v160
    %v926 = vsub.f32 %v904, %v924
    %v927 = vsub.f32 %v906, %v925
    %v928 = vmul.f32 %v926, %v926
    %v929 = vmul.f32 %v927, %v927
    %v930 = vrot.slane %v928, 4
    %v931 = vadd.f32 %v928, %v930
    %v932 = vrot.slane %v931, 2
    %v933 = vadd.f32 %v931, %v932
    %v934 = vrot.slane %v933, 1
    %v935 = vadd.f32 %v933, %v934
    %v936 = vrot.slane %v929, 4
    %v937 = vadd.f32 %v929, %v936
    %v938 = vrot.slane %v937, 2
    %v939 = vadd.f32 %v937, %v938
    %v940 = vrot.slane %v939, 1
    %v941 = vadd.f32 %v939, %v940
    %v942 = vmul.f32 %v935, %v160
    %v943 = vmul.f32 %v941, %v160
    %v944 = vadd.f32 %v942, 1e-05
    %v945 = vadd.f32 %v943, 1e-05
    %v946 = vrsqrt.pop %v944
    %v947 = vrsqrt.pop %v945
    %v950 = vcombine.low %v946, %v947
    %v952 = vunpack.c.l.s4 1966171168
    %v953 = vunpack.c.0.s8 %v952
    %v954 = vlaneseq
    %v955 = vshrl.u32 %v954, 7
    %v956 = vsub.s32 %v953, %v955
    %v957 = vrot.slane %v950, %v956
    %v959 = vunpack.c.l.s4 1966171168
    %v960 = vunpack.c.0.s8 %v959
    %v961 = vlaneseq
    %v962 = vshrl.u32 %v961, 7
    %v963 = vsub.s32 %v960, %v962
    %v964 = vrot.slane %v957, %v963
    %v966 = vmul.f32 %v909, %v964
    %v968 = vlaneseq
    %v969 = vshrl.u32 %v968, 7
    %v970 = vsub.s32 0, %v969
    %v971 = vrot.slane %v966, %v970
    %v972 = vlaneseq
    %v973 = vshrl.u32 %v972, 7
    %v974 = vsub.s32 1, %v973
    %v975 = vrot.slane %v966, %v974
    %v978 = vmul.f32 %v924, %v971
    %v979 = vmul.f32 %v925, %v975
    %v982 = vcombine.low %v978, %v979
    %v984 = vunpack.c.l.s4 1966171168
    %v985 = vunpack.c.0.s8 %v984
    %v986 = vlaneseq
    %v987 = vshrl.u32 %v986, 7
    %v988 = vsub.s32 %v985, %v987
    %v989 = vrot.slane %v982, %v988
    %v991 = vunpack.c.l.s4 1966171168
    %v992 = vunpack.c.0.s8 %v991
    %v993 = vlaneseq
    %v994 = vshrl.u32 %v993, 7
    %v995 = vsub.s32 %v992, %v994
    %v996 = vrot.slane %v989, %v995
    %v998 = vsub.f32 %v911, %v996
    %v999 = vmul.f32 %v904, %v971
    %v1000 = vmul.f32 %v906, %v975
    %v1002 = vlaneseq
    %v1003 = vshrl.u32 %v1002, 7
    %v1004 = vsub.s32 0, %v1003
    %v1005 = vrot.slane %v998, %v1004
    %v1006 = vlaneseq
    %v1007 = vshrl.u32 %v1006, 7
    %v1008 = vsub.s32 1, %v1007
    %v1009 = vrot.slane %v998, %v1008
    %v1012 = vadd.f32 %v999, %v1005
    %v1013 = vadd.f32 %v1000, %v1009
    %v1014 = vmax.f32 %v1012, 0.0
    %v1015 = vmax.f32 %v1013, 0.0
    %v1016 = vld [vmem:[#allocation9] sm:$0xff]
    %v1017 = vld [vmem:[#allocation9 + $0x8] sm:$0xff]
    %v1018 = vld [vmem:[#allocation9 + $0x10] sm:$0xff]
    %v1019 = vld [vmem:[#allocation9 + $0x18] sm:$0xff]
    %v1020 = vld [vmem:[#allocation9 + $0x20] sm:$0xff]
    %v1021 = vld [vmem:[#allocation9 + $0x28] sm:$0xff]
    %v1022 = vld [vmem:[#allocation9 + $0x30] sm:$0xff]
    %v1023 = vld [vmem:[#allocation9 + $0x38] sm:$0xff]
    %v1024 = vld [vmem:[#allocation9 + $0x40] sm:$0xff]
    %v1025 = vld [vmem:[#allocation9 + $0x48] sm:$0xff]
    %v1026 = vld [vmem:[#allocation9 + $0x50] sm:$0xff]
    %v1027 = vld [vmem:[#allocation9 + $0x58] sm:$0xff]
    %v1028 = vld [vmem:[#allocation9 + $0x60] sm:$0xff]
    %v1029 = vld [vmem:[#allocation9 + $0x68] sm:$0xff]
    %v1030 = vld [vmem:[#allocation9 + $0x70] sm:$0xff]
    %v1031 = vld [vmem:[#allocation9 + $0x78] sm:$0xff]
    %v1032 = vld [vmem:[#allocation9 + $0x80] sm:$0xff]
    %v1033 = vld [vmem:[#allocation9 + $0x88] sm:$0xff]
    %v1034 = vld [vmem:[#allocation9 + $0x90] sm:$0xff]
    %v1035 = vld [vmem:[#allocation9 + $0x98] sm:$0xff]
    %v1036 = vld [vmem:[#allocation9 + $0xa0] sm:$0xff]
    %v1037 = vld [vmem:[#allocation9 + $0xa8] sm:$0xff]
    %v1038 = vld [vmem:[#allocation9 + $0xb0] sm:$0xff]
    %v1039 = vld [vmem:[#allocation9 + $0xb8] sm:$0xff]
    %v1040 = vld [vmem:[#allocation9 + $0xc0] sm:$0xff]
    %v1041 = vld [vmem:[#allocation9 + $0xc8] sm:$0xff]
    %v1042 = vld [vmem:[#allocation9 + $0xd0] sm:$0xff]
    %v1043 = vld [vmem:[#allocation9 + $0xd8] sm:$0xff]
    %v1044 = vld [vmem:[#allocation9 + $0xe0] sm:$0xff]
    %v1045 = vld [vmem:[#allocation9 + $0xe8] sm:$0xff]
    %v1046 = vld [vmem:[#allocation9 + $0xf0] sm:$0xff]
    %v1047 = vld [vmem:[#allocation9 + $0xf8] sm:$0xff]
    %v1048 = vld [vmem:[#allocation9 + $0x100] sm:$0x1]
    %v1049 = vlaneseq
    %v1050 = vshrl.u32 %v1049, 7
    %v1051 = vsub.s32 0, %v1050
    %v1052 = vrot.slane %v1048, %v1051
    %1053 = vmatprep.subr.mxu0 0.0
    %1054 = vmatpush1.msra.mxu0 %v1031
    %1055 = vmatprep.subr.mxu0 0.0
    %1056 = vmatpush1.msra.mxu0 %v1030
    %1057 = vmatprep.subr.mxu0 0.0
    %1058 = vmatpush1.msra.mxu0 %v1029
    %1059 = vmatprep.subr.mxu0 0.0
    %1060 = vmatpush1.msra.mxu0 %v1028
    %1061 = vmatprep.subr.mxu0 0.0
    %1062 = vmatpush1.msra.mxu0 %v1027
    %1063 = vmatprep.subr.mxu0 0.0
    %1064 = vmatpush1.msra.mxu0 %v1026
    %1065 = vmatprep.subr.mxu0 0.0
    %1066 = vmatpush1.msra.mxu0 %v1025
    %1067 = vmatprep.subr.mxu0 0.0
    %1068 = vmatpush1.msra.mxu0 %v1024
    %1069 = vmatprep.subr.mxu0 0.0
    %1070 = vmatpush1.msra.mxu0 %v1023
    %1071 = vmatprep.subr.mxu0 0.0
    %1072 = vmatpush1.msra.mxu0 %v1022
    %1073 = vmatprep.subr.mxu0 0.0
    %1074 = vmatpush1.msra.mxu0 %v1021
    %1075 = vmatprep.subr.mxu0 0.0
    %1076 = vmatpush1.msra.mxu0 %v1020
    %1077 = vmatprep.subr.mxu0 0.0
    %1078 = vmatpush1.msra.mxu0 %v1019
    %1079 = vmatprep.subr.mxu0 0.0
    %1080 = vmatpush1.msra.mxu0 %v1018
    %1081 = vmatprep.subr.mxu0 0.0
    %1082 = vmatpush1.msra.mxu0 %v1017
    %1083 = vmatprep.subr.mxu0 0.0
    %1084 = vmatpush1.msra.mxu0 %v1016
    %1085 = vmatprep.subr.mxu0 0.0
    %1086 = vmatpush2.msra.mxu0 %v1047
    %1087 = vmatprep.subr.mxu0 0.0
    %1088 = vmatpush2.msra.mxu0 %v1046
    %1089 = vmatprep.subr.mxu0 0.0
    %1090 = vmatpush2.msra.mxu0 %v1045
    %1091 = vmatprep.subr.mxu0 0.0
    %1092 = vmatpush2.msra.mxu0 %v1044
    %1093 = vmatprep.subr.mxu0 0.0
    %1094 = vmatpush2.msra.mxu0 %v1043
    %1095 = vmatprep.subr.mxu0 0.0
    %1096 = vmatpush2.msra.mxu0 %v1042
    %1097 = vmatprep.subr.mxu0 0.0
    %1098 = vmatpush2.msra.mxu0 %v1041
    %1099 = vmatprep.subr.mxu0 0.0
    %1100 = vmatpush2.msra.mxu0 %v1040
    %1101 = vmatprep.subr.mxu0 0.0
    %1102 = vmatpush2.msra.mxu0 %v1039
    %1103 = vmatprep.subr.mxu0 0.0
    %1104 = vmatpush2.msra.mxu0 %v1038
    %1105 = vmatprep.subr.mxu0 0.0
    %1106 = vmatpush2.msra.mxu0 %v1037
    %1107 = vmatprep.subr.mxu0 0.0
    %1108 = vmatpush2.msra.mxu0 %v1036
    %1109 = vmatprep.subr.mxu0 0.0
    %1110 = vmatpush2.msra.mxu0 %v1035
    %1111 = vmatprep.subr.mxu0 0.0
    %1112 = vmatpush2.msra.mxu0 %v1034
    %1113 = vmatprep.subr.mxu0 0.0
    %1114 = vmatpush2.msra.mxu0 %v1033
    %1115 = vmatprep.subr.mxu0 0.0
    %1116 = vmatpush2.msra.mxu0 %v1032
    %1117 = vmatprep.mubr.f32.mxu0 %v1015
    %1118 = vmatmul.mubr.f32.gmra.mxu0 %v1014
    %v1119 = vpop.f32.mrf.mxu0
    %v1120 = vadd.f32 %v1052, %v1119
    %v1121 = vpop.f32.mrf.mxu0
    %1122 = vdwg.mxu0
    %1123 = vst [vmem:[#allocation10] sm:$0xff] %v1120
    // Predicated region
    $region38: #{tpu_custom_call.1} parent=1 // pred_check
      _
    $region39: #{tpu_custom_call.1} parent=1 // pred_check_branch
      %1125 = sbr.rel (0) target = $region41
    $region40: #{tpu_custom_call.1} parent=1 // pred_region
      %s1127 = ssub.s32 128, 128
      %1128 = vsyncadd [#allocation6], %s1127
      %s1130 = sshll.u32 [#allocation10], 4
      %s1131 = int_to_ptr.vmem [resolvable:$true] %s1130
      %1133 = dma.vmem_to_hbm [thread:$0]  %s1131, 128, %s4, [#allocation6]
    $region41: #{tpu_custom_call.1} parent=1 // pred_fallthru
      _
    // Predicated region
    $region42: #{tpu_custom_call.1} parent=1 // pred_check
      _
    $region43: #{tpu_custom_call.1} parent=1 // pred_check_branch
      %1135 = sbr.rel (0) target = $region45
    $region44: #{tpu_custom_call.1} parent=1 // pred_region
      %1136 = dma.done [#allocation6], 128
    $region45: #{tpu_custom_call.1} parent=1 // pred_fallthru
      _
    %1137 = vsyncpa [#allocation5], 1
    %1138 = vsyncpa [#allocation8], 1
    %1139 = vsyncpa [#allocation6], 1
  %1140 = vsyncmov [#allocation3]
  %s1141 = vpop.sfrf %1140
  %p1142 = scmp.eq.s32.totalorder %s1141, 0
  %p1143 = pneg %p1142
  %1145 = shalt.err (%p1143)
  %s1146 = scalar_lea.sflag [#allocation3], 1
  %1147 = vsyncmov %s1146
  %s1148 = vpop.sfrf %1147
  %p1149 = scmp.eq.s32.totalorder %s1148, 0
  %p1150 = pneg %p1149
  %1152 = shalt.err (%p1150)

</llo_original>
